<compile_context>
chip_gen: v7x
topology: tpu7x:2x2x1
jax: 0.10.0
libtpu: 0.0.40
codegen_flags: <defaults>
</compile_context>

<pallas_src>
import jax
import jax.numpy as jnp
from jax.experimental import pallas as pl
from jax.experimental.pallas import tpu as pltpu


def _round_up(v, m):
    return (v + m - 1) // m * m


# --------------------------------------------------------------------------
# Kernels
# --------------------------------------------------------------------------
def _mlp_fused_kernel(x_ref, w1_ref, b1_ref, w2_ref, o_ref):
    """out_tile = relu(x_tile @ W1 + b1) @ W2 in one shot.

    Used by (a) the no-grid fast path (refs are the full arrays) and (b) the
    weight-resident grid path (weights have constant index_maps, fetched once).
    """
    h = jnp.dot(x_ref[...], w1_ref[...], preferred_element_type=jnp.float32)
    h = jnp.maximum(h + b1_ref[...], 0.0)
    o_ref[...] = jnp.dot(h.astype(w2_ref.dtype), w2_ref[...],
                         preferred_element_type=jnp.float32).astype(o_ref.dtype)


def _mlp_ktiled_kernel(x_ref, w1_ref, b1_ref, w2_ref, o_ref):
    """K-tiled over the intermediate dim I; accumulates into the f32 out block.

    o_ref block index is constant along k (the last grid axis), so the output
    tile stays VMEM-resident across k and doubles as the accumulator.
    """
    k = pl.program_id(1)

    @pl.when(k == 0)
    def _init():
        o_ref[...] = jnp.zeros_like(o_ref)

    h = jnp.dot(x_ref[...], w1_ref[...], preferred_element_type=jnp.float32)
    h = jnp.maximum(h + b1_ref[...], 0.0)
    o_ref[...] += jnp.dot(h.astype(w2_ref.dtype), w2_ref[...],
                          preferred_element_type=jnp.float32)


# --------------------------------------------------------------------------
# VMEM accounting / tile selection
# --------------------------------------------------------------------------
def _vmem_bytes(tb, tk, D, out_itemsize):
    """Conservative per-kernel VMEM estimate for one (tb, tk) configuration."""
    return (2 * tb * D * 2            # x tiles (bf16, double-buffered)
            + 2 * D * tk * 2          # W1 chunks (bf16, double-buffered)
            + 2 * 8 * tk * 4          # b1 chunks (f32, sublane-padded)
            + 2 * tk * D * 2          # W2 chunks (bf16, double-buffered)
            + 2 * tb * D * out_itemsize   # out tiles (double-buffered)
            + tb * tk * 4 + tb * tk * 2)  # h intermediate (f32) + bf16 cast copy


def _choose_tiles(B, D, I, usable, out_itemsize, tb_req, tk_req):
    """Pick (tb, tk).  tk == I means the weights are fully VMEM-resident."""
    Bp16 = max(16, _round_up(B, 16))

    # --- tk: prefer full residency, else largest 128-multiple divisor of I.
    if tk_req is not None:
        tk = tk_req
        assert I % tk == 0 and tk % 128 == 0, "tk must be a 128-multiple divisor of I"
    elif _vmem_bytes(128, I, D, out_itemsize) <= usable:
        tk = I                                        # weights resident
    else:
        tk = 128
        for cand in range(min(I, 512), 0, -128):
            if I % cand == 0 and _vmem_bytes(128, cand, D, out_itemsize) <= usable:
                tk = cand
                break

    # --- tb: largest of {512, 256, 128} that fits VMEM with this tk.
    if tb_req is not None:
        tb = tb_req
    else:
        tb = 128
        for cand in (512, 256, 128):
            if _vmem_bytes(cand, tk, D, out_itemsize) <= usable:
                tb = cand
                break

    # Clamp to the (padded) batch; keep bf16 sublane alignment (multiple of 16).
    tb = max(16, min(_round_up(tb, 16), Bp16))
    # Keep >= 2 batch tiles when possible so v7x's second TensorCore gets work.
    while tb > 128 and Bp16 <= tb:
        tb //= 2
    tb = _round_up(tb, 16)
    return tb, tk


# --------------------------------------------------------------------------
# Wrapper
# --------------------------------------------------------------------------
def mlp_forward(x, w1, b1, w2, *, tb=None, tk=None, vmem_limit_bytes=None):
    """out = relu(x @ w1 + b1) @ w2 with w1:(D,I), b1:(I,), w2:(I,D)."""
    B, D = x.shape
    I = w1.shape[1]
    assert w1.shape == (D, I) and w2.shape == (I, D) and b1.shape == (I,)
    assert D % 128 == 0 and I % 128 == 0, "feature dims must be lane-aligned"

    out_dtype = x.dtype
    out_isz = jnp.dtype(out_dtype).itemsize

    # Generation-aware VMEM budget (v5e/v6e: 128 MiB, v7x: 64 MiB per TC).
    if vmem_limit_bytes is None:
        try:
            cap = pltpu.get_tpu_info().vmem_capacity_bytes
        except Exception:
            cap = 64 * 1024 * 1024
        usable = min(int(cap * 0.85), cap - 8 * 1024 * 1024)
    else:
        usable = int(vmem_limit_bytes)
    usable = int(usable)

    # bf16 on the MXU, f32 accumulation.  Bias stays f32 for the VPU add.
    x_bf = x.astype(jnp.bfloat16)
    w1_bf = w1.astype(jnp.bfloat16)
    w2_bf = w2.astype(jnp.bfloat16)
    b1_2d = b1.reshape(1, I).astype(jnp.float32)

    # ------------- no-grid fast path for small problems ---------------------
    Bp16 = max(16, _round_up(B, 16))
    small_bytes = (Bp16 * D * 2 + D * I * 2 + 8 * I * 4 + I * D * 2
                   + Bp16 * D * out_isz
                   + Bp16 * I * 4 + Bp16 * I * 2)
    if tb is None and tk is None and Bp16 <= 256 and small_bytes <= usable:
        xp = jnp.pad(x_bf, ((0, Bp16 - B), (0, 0))) if Bp16 != B else x_bf
        cost = pl.CostEstimate(
            flops=4 * Bp16 * D * I, transcendentals=0,
            bytes_accessed=(Bp16 * D * 2 + D * I * 2 + I * 4 + I * D * 2
                            + Bp16 * D * out_isz))
        out = pl.pallas_call(
            _mlp_fused_kernel,
            out_shape=jax.ShapeDtypeStruct((Bp16, D), out_dtype),
            in_specs=[pl.BlockSpec(memory_space=pltpu.MemorySpace.VMEM)] * 4,
            out_specs=pl.BlockSpec(memory_space=pltpu.MemorySpace.VMEM),
            compiler_params=pltpu.CompilerParams(vmem_limit_bytes=usable),
            cost_estimate=cost,
        )(xp, w1_bf, b1_2d, w2_bf)
        return out[:B]

    # ------------- tiled grid paths ------------------------------------------
    tb_sel, tk_sel = _choose_tiles(B, D, I, usable, 4, tb, tk)
    resident = (tk_sel == I)

    Bp = _round_up(B, tb_sel)
    if Bp != B:
        x_bf = jnp.pad(x_bf, ((0, Bp - B), (0, 0)))
    nb = Bp // tb_sel

    if resident:
        # Weights fetched once (constant index_maps), reused by every batch tile.
        cost = pl.CostEstimate(
            flops=4 * Bp * D * I, transcendentals=0,
            bytes_accessed=(Bp * D * 2 + D * I * 2 + I * 4 + I * D * 2
                            + Bp * D * out_isz))
        out = pl.pallas_call(
            _mlp_fused_kernel,
            out_shape=jax.ShapeDtypeStruct((Bp, D), out_dtype),
            grid_spec=pltpu.PrefetchScalarGridSpec(
                num_scalar_prefetch=0,
                grid=(nb,),
                in_specs=[
                    pl.BlockSpec((tb_sel, D), lambda i: (i, 0)),   # x tile
                    pl.BlockSpec((D, I), lambda i: (0, 0)),        # W1 (resident)
                    pl.BlockSpec((1, I), lambda i: (0, 0)),        # b1 (resident)
                    pl.BlockSpec((I, D), lambda i: (0, 0)),        # W2 (resident)
                ],
                out_specs=pl.BlockSpec((tb_sel, D), lambda i: (i, 0)),
            ),
            compiler_params=pltpu.CompilerParams(
                dimension_semantics=("parallel",),
                vmem_limit_bytes=usable),
            cost_estimate=cost,
        )(x_bf, w1_bf, b1_2d, w2_bf)
        return out[:B]

    # K-tiled fallback for weights too large to be VMEM-resident.
    # TODO(synk): if profiling shows exposed weight DMA here, try
    # pipeline_mode=pl.Buffered(3) on the W1/W2 BlockSpecs.
    nk = I // tk_sel
    cost = pl.CostEstimate(
        flops=4 * Bp * D * I, transcendentals=0,
        bytes_accessed=(Bp * D * 2
                        + nb * (D * I * 2 + I * 4 + I * D * 2)  # weights re-read / batch tile
                        + Bp * D * 4))
    out_f32 = pl.pallas_call(
        _mlp_ktiled_kernel,
        out_shape=jax.ShapeDtypeStruct((Bp, D), jnp.float32),
        grid_spec=pltpu.PrefetchScalarGridSpec(
            num_scalar_prefetch=0,
            grid=(nb, nk),
            in_specs=[
                pl.BlockSpec((tb_sel, D), lambda i, k: (i, 0)),    # x tile (k-invariant)
                pl.BlockSpec((D, tk_sel), lambda i, k: (0, k)),    # W1 chunk
                pl.BlockSpec((1, tk_sel), lambda i, k: (0, k)),    # b1 chunk
                pl.BlockSpec((tk_sel, D), lambda i, k: (k, 0)),    # W2 chunk
            ],
            out_specs=pl.BlockSpec((tb_sel, D), lambda i, k: (i, 0)),
        ),
        compiler_params=pltpu.CompilerParams(
            dimension_semantics=("parallel", "arbitrary"),
            vmem_limit_bytes=usable),
        cost_estimate=cost,
    )(x_bf, w1_bf, b1_2d, w2_bf)
    return out_f32[:B].astype(out_dtype)


def mlp_reference(x, w1, b1, w2):
    h = jnp.maximum(x @ w1 + b1, 0.0)
    return h @ w2


if __name__ == "__main__":
    # Small shapes consistent with the module (intermediate = 2 * dim).
    dim = 256
    inter = 2 * dim          # 512

    key = jax.random.PRNGKey(0)
    k_x, k_w1, k_b1, k_w2, k_x2 = jax.random.split(key, 5)

    # PyTorch nn.Linear-style uniform(-1/sqrt(fan_in), 1/sqrt(fan_in)) init.
    bound1 = 1.0 / jnp.sqrt(dim)
    bound2 = 1.0 / jnp.sqrt(inter)
    w1 = jax.random.uniform(k_w1, (dim, inter), jnp.float32, -bound1, bound1)
    b1 = jax.random.uniform(k_b1, (inter,), jnp.float32, -bound1, bound1)
    w2 = jax.random.uniform(k_w2, (inter, dim), jnp.float32, -bound2, bound2)

    tol = dict(atol=3e-2, rtol=3e-2)   # bf16 MXU inputs vs full-f32 reference

    # 1) Demo shapes -> no-grid fast path.
    x = jax.random.normal(k_x, (256, dim), dtype=jnp.float32)
    out = jax.block_until_ready(mlp_forward(x, w1, b1, w2))
    ref = mlp_reference(x, w1, b1, w2)
    assert out.shape == ref.shape
    assert jnp.allclose(out, ref, **tol), float(jnp.max(jnp.abs(out - ref)))

    # 2) Larger ragged batch -> weight-resident grid path (>= 2 batch tiles).
    x2 = jax.random.normal(k_x2, (640, dim), dtype=jnp.float32)
    out2 = jax.block_until_ready(mlp_forward(x2, w1, b1, w2))
    ref2 = mlp_reference(x2, w1, b1, w2)
    assert out2.shape == ref2.shape
    assert jnp.allclose(out2, ref2, **tol), float(jnp.max(jnp.abs(out2 - ref2)))

    # 3) Force the K-tiled fallback (exercises the accumulate-into-output path).
    out3 = jax.block_until_ready(mlp_forward(x2, w1, b1, w2, tb=128, tk=256))
    assert jnp.allclose(out3, ref2, **tol), float(jnp.max(jnp.abs(out3 - ref2)))

    print("KERNEL_OK")
</pallas_src>

<mosaic_0001>
module attributes {stable_mosaic.version = 11 : i64} {
  func.func @_mlp_fused_kernel(%arg0: memref<256x256xbf16, #tpu.memory_space<vmem>>, %arg1: memref<256x512xbf16, #tpu.memory_space<vmem>>, %arg2: memref<1x512xf32, #tpu.memory_space<vmem>>, %arg3: memref<512x256xbf16, #tpu.memory_space<vmem>>, %arg4: memref<256x256xf32, #tpu.memory_space<vmem>>) attributes {dimension_semantics = [], scalar_prefetch = 0 : i64, scratch_operands = 0 : i64, tpu.core_type = #tpu.core_type<tc>} {
    %c0 = arith.constant 0 : index
    %c0_0 = arith.constant 0 : index
    %0 = vector.load %arg0[%c0, %c0_0] : memref<256x256xbf16, #tpu.memory_space<vmem>>, vector<256x256xbf16>
    %c0_1 = arith.constant 0 : index
    %c0_2 = arith.constant 0 : index
    %1 = vector.load %arg1[%c0_1, %c0_2] : memref<256x512xbf16, #tpu.memory_space<vmem>>, vector<256x512xbf16>
    %cst = arith.constant dense<0.000000e+00> : vector<256x512xf32>
    %2 = tpu.matmul %0, %1, %cst {dimension_numbers = #tpu.dot_dimension_numbers<[1], [0], [0], [1], [0, 0, 1, 1], [], []>} : vector<256x256xbf16>, vector<256x512xbf16>, vector<256x512xf32> -> vector<256x512xf32>
    %c0_3 = arith.constant 0 : index
    %c0_4 = arith.constant 0 : index
    %3 = vector.load %arg2[%c0_3, %c0_4] : memref<1x512xf32, #tpu.memory_space<vmem>>, vector<1x512xf32>
    %4 = vector.broadcast %3 : vector<1x512xf32> to vector<256x512xf32>
    %5 = arith.addf %2, %4 : vector<256x512xf32>
    %cst_5 = arith.constant 0.000000e+00 : f32
    %6 = vector.broadcast %cst_5 : f32 to vector<256x512xf32>
    %7 = arith.maximumf %5, %6 : vector<256x512xf32>
    %8 = arith.truncf %7 : vector<256x512xf32> to vector<256x512xbf16>
    %c0_6 = arith.constant 0 : index
    %c0_7 = arith.constant 0 : index
    %9 = vector.load %arg3[%c0_6, %c0_7] : memref<512x256xbf16, #tpu.memory_space<vmem>>, vector<512x256xbf16>
    %cst_8 = arith.constant dense<0.000000e+00> : vector<256x256xf32>
    %10 = tpu.matmul %8, %9, %cst_8 {dimension_numbers = #tpu.dot_dimension_numbers<[1], [0], [0], [1], [0, 0, 1, 1], [], []>} : vector<256x512xbf16>, vector<512x256xbf16>, vector<256x256xf32> -> vector<256x256xf32>
    %c0_9 = arith.constant 0 : index
    %c0_10 = arith.constant 0 : index
    %11 = vector.load %arg4[%c0_9, %c0_10] : memref<256x256xf32, #tpu.memory_space<vmem>>, vector<256x256xf32>
    tpu.vector_store %arg4[%c0_9, %c0_10], %10 {strides = array<i32>} : memref<256x256xf32, #tpu.memory_space<vmem>>, vector<256x256xf32>,
    return
  }
}

</mosaic_0001>

<llo_original>
// kernel: tpu_custom_call.1
$region0: #{tpu_custom_call.1}
  #allocation0 [shape = 'u32[]', space=smem, size = 0x4, offset = 0x4, fixed_abs, tag = 'smem constant byte address 0x4 - core index']
  #allocation1 [shape = 'u32[144,128]{1,0:T(1,128)}', space=vmem, size = 0x12000, scoped, tag = 'internal scratch']
  %s0 = inlined_call_operand.hbm [shape: bf16[256,256], index: 0, kind: input, shape index: {}]
  %s1 = inlined_call_operand.hbm [shape: bf16[256,512], index: 1, kind: input, shape index: {}]
  %s2 = inlined_call_operand.vmem [shape: f32[1,512], index: 2, kind: input, shape index: {}]
  %s3 = inlined_call_operand.hbm [shape: bf16[512,256], index: 3, kind: input, shape index: {}]
  %s4 = inlined_call_operand.hbm [shape: f32[256,256], index: 4, kind: output, shape index: {}]
  %s5 = sld [smem:[#allocation0]]
  $region38: #{tpu_custom_call.1} parent=0
    _
  %s7 = ssub.s32 1, %s5
  %s8 = scalar_select 0, %s7, %s5
  $region1: #{tpu_custom_call.1} parent=0
    #allocation2 [shape = 'u8[131072]{0}', space=vmem, size = 0x20000, scoped, tag = 'input window, operand 0, single buffered']
    #allocation3 [shape = 's32[1]{0}', space=sflag, size = 0x4, scoped, tag = 'scoped memory for tpu_custom_call.1']
    #allocation4 [shape = 's32[1]{0}', space=sflag, size = 0x4, scoped, tag = 'scoped memory for tpu_custom_call.1']
    #allocation5 [shape = 'u8[262144]{0}', space=vmem, size = 0x40000, scoped, tag = 'input window, operand 1, single buffered']
    #allocation6 [shape = 's32[1]{0}', space=sflag, size = 0x4, scoped, tag = 'scoped memory for tpu_custom_call.1']
    #allocation7 [shape = 'u8[262144]{0}', space=vmem, size = 0x40000, scoped, tag = 'input window, operand 3, single buffered']
    #allocation8 [shape = 'u8[262144]{0}', space=vmem, size = 0x40000, scoped, tag = 'output window, operand 0, single buffered']
    %9 = vsyncpa [#allocation3], 0
    %10 = vsyncpa [#allocation6], 0
    %11 = vsyncpa [#allocation4], 0
    // Predicated region
    $region2: #{tpu_custom_call.1} parent=1 // pred_check
      _
    $region3: #{tpu_custom_call.1} parent=1 // pred_check_branch
      %13 = sbr.rel (0) target = $region5
    $region4: #{tpu_custom_call.1} parent=1 // pred_region
      %s15 = ssub.s32 4096, 4096
      %16 = vsyncadd [#allocation3], %s15
      %s17 = sshll.u32 [#allocation2], 4
      %s18 = int_to_ptr.vmem [resolvable:$true] %s17
      %23 = dma.hbm_to_vmem [thread:$0]  %s0, 4096, %s18, [#allocation3], 128, 128, 8
    $region5: #{tpu_custom_call.1} parent=1 // pred_fallthru
      _
    // Predicated region
    $region6: #{tpu_custom_call.1} parent=1 // pred_check
      _
    $region7: #{tpu_custom_call.1} parent=1 // pred_check_branch
      %25 = sbr.rel (0) target = $region9
    $region8: #{tpu_custom_call.1} parent=1 // pred_region
      %s27 = ssub.s32 8192, 8192
      %28 = vsyncadd [#allocation6], %s27
      %s29 = sshll.u32 [#allocation5], 4
      %s30 = int_to_ptr.vmem [resolvable:$true] %s29
      %35 = dma.hbm_to_vmem [thread:$0]  %s1, 8192, %s30, [#allocation6], 256, 256, 16
    $region9: #{tpu_custom_call.1} parent=1 // pred_fallthru
      _
    // Predicated region
    $region10: #{tpu_custom_call.1} parent=1 // pred_check
      _
    $region11: #{tpu_custom_call.1} parent=1 // pred_check_branch
      %37 = sbr.rel (0) target = $region13
    $region12: #{tpu_custom_call.1} parent=1 // pred_region
      _
    $region13: #{tpu_custom_call.1} parent=1 // pred_fallthru
      _
    // Predicated region
    $region14: #{tpu_custom_call.1} parent=1 // pred_check
      _
    $region15: #{tpu_custom_call.1} parent=1 // pred_check_branch
      %39 = sbr.rel (0) target = $region17
    $region16: #{tpu_custom_call.1} parent=1 // pred_region
      %s41 = ssub.s32 8192, 8192
      %42 = vsyncadd [#allocation6], %s41
      %s43 = sshll.u32 [#allocation7], 4
      %s44 = int_to_ptr.vmem [resolvable:$true] %s43
      %49 = dma.hbm_to_vmem [thread:$0]  %s3, 8192, %s44, [#allocation6], 128, 128, 8
    $region17: #{tpu_custom_call.1} parent=1 // pred_fallthru
      _
    // Predicated region
    $region18: #{tpu_custom_call.1} parent=1 // pred_check
      _
    $region19: #{tpu_custom_call.1} parent=1 // pred_check_branch
      %51 = sbr.rel (0) target = $region21
    $region20: #{tpu_custom_call.1} parent=1 // pred_region
      %52 = dma.done [#allocation3], 4096
    $region21: #{tpu_custom_call.1} parent=1 // pred_fallthru
      _
    // Predicated region
    $region22: #{tpu_custom_call.1} parent=1 // pred_check
      _
    $region23: #{tpu_custom_call.1} parent=1 // pred_check_branch
      %54 = sbr.rel (0) target = $region25
    $region24: #{tpu_custom_call.1} parent=1 // pred_region
      %55 = dma.done [#allocation6], 8192
    $region25: #{tpu_custom_call.1} parent=1 // pred_fallthru
      _
    // Predicated region
    $region26: #{tpu_custom_call.1} parent=1 // pred_check
      _
    $region27: #{tpu_custom_call.1} parent=1 // pred_check_branch
      %57 = sbr.rel (0) target = $region29
    $region28: #{tpu_custom_call.1} parent=1 // pred_region
      %58 = dma.done [#allocation6], 8192
    $region29: #{tpu_custom_call.1} parent=1 // pred_fallthru
      _
    %v59 = vld [vmem:[#allocation2] sm:$0xff]
    %v60 = vld [vmem:[#allocation2 + $0x8] sm:$0xff]
    %v61 = vld [vmem:[#allocation2 + $0x10] sm:$0xff]
    %v62 = vld [vmem:[#allocation2 + $0x18] sm:$0xff]
    %v63 = vld [vmem:[#allocation2 + $0x20] sm:$0xff]
    %v64 = vld [vmem:[#allocation2 + $0x28] sm:$0xff]
    %v65 = vld [vmem:[#allocation2 + $0x30] sm:$0xff]
    %v66 = vld [vmem:[#allocation2 + $0x38] sm:$0xff]
    %v67 = vld [vmem:[#allocation2 + $0x40] sm:$0xff]
    %v68 = vld [vmem:[#allocation2 + $0x48] sm:$0xff]
    %v69 = vld [vmem:[#allocation2 + $0x50] sm:$0xff]
    %v70 = vld [vmem:[#allocation2 + $0x58] sm:$0xff]
    %v71 = vld [vmem:[#allocation2 + $0x60] sm:$0xff]
    %v72 = vld [vmem:[#allocation2 + $0x68] sm:$0xff]
    %v73 = vld [vmem:[#allocation2 + $0x70] sm:$0xff]
    %v74 = vld [vmem:[#allocation2 + $0x78] sm:$0xff]
    %v75 = vld [vmem:[#allocation2 + $0x80] sm:$0xff]
    %v76 = vld [vmem:[#allocation2 + $0x88] sm:$0xff]
    %v77 = vld [vmem:[#allocation2 + $0x90] sm:$0xff]
    %v78 = vld [vmem:[#allocation2 + $0x98] sm:$0xff]
    %v79 = vld [vmem:[#allocation2 + $0xa0] sm:$0xff]
    %v80 = vld [vmem:[#allocation2 + $0xa8] sm:$0xff]
    %v81 = vld [vmem:[#allocation2 + $0xb0] sm:$0xff]
    %v82 = vld [vmem:[#allocation2 + $0xb8] sm:$0xff]
    %v83 = vld [vmem:[#allocation2 + $0xc0] sm:$0xff]
    %v84 = vld [vmem:[#allocation2 + $0xc8] sm:$0xff]
    %v85 = vld [vmem:[#allocation2 + $0xd0] sm:$0xff]
    %v86 = vld [vmem:[#allocation2 + $0xd8] sm:$0xff]
    %v87 = vld [vmem:[#allocation2 + $0xe0] sm:$0xff]
    %v88 = vld [vmem:[#allocation2 + $0xe8] sm:$0xff]
    %v89 = vld [vmem:[#allocation2 + $0xf0] sm:$0xff]
    %v90 = vld [vmem:[#allocation2 + $0xf8] sm:$0xff]
    %v91 = vld [vmem:[#allocation5] sm:$0xff]
    %v92 = vld [vmem:[#allocation5 + $0x8] sm:$0xff]
    %v93 = vld [vmem:[#allocation5 + $0x10] sm:$0xff]
    %v94 = vld [vmem:[#allocation5 + $0x18] sm:$0xff]
    %v95 = vld [vmem:[#allocation5 + $0x20] sm:$0xff]
    %v96 = vld [vmem:[#allocation5 + $0x28] sm:$0xff]
    %v97 = vld [vmem:[#allocation5 + $0x30] sm:$0xff]
    %v98 = vld [vmem:[#allocation5 + $0x38] sm:$0xff]
    %v99 = vld [vmem:[#allocation5 + $0x40] sm:$0xff]
    %v100 = vld [vmem:[#allocation5 + $0x48] sm:$0xff]
    %v101 = vld [vmem:[#allocation5 + $0x50] sm:$0xff]
    %v102 = vld [vmem:[#allocation5 + $0x58] sm:$0xff]
    %v103 = vld [vmem:[#allocation5 + $0x60] sm:$0xff]
    %v104 = vld [vmem:[#allocation5 + $0x68] sm:$0xff]
    %v105 = vld [vmem:[#allocation5 + $0x70] sm:$0xff]
    %v106 = vld [vmem:[#allocation5 + $0x78] sm:$0xff]
    %v107 = vld [vmem:[#allocation5 + $0x80] sm:$0xff]
    %v108 = vld [vmem:[#allocation5 + $0x88] sm:$0xff]
    %v109 = vld [vmem:[#allocation5 + $0x90] sm:$0xff]
    %v110 = vld [vmem:[#allocation5 + $0x98] sm:$0xff]
    %v111 = vld [vmem:[#allocation5 + $0xa0] sm:$0xff]
    %v112 = vld [vmem:[#allocation5 + $0xa8] sm:$0xff]
    %v113 = vld [vmem:[#allocation5 + $0xb0] sm:$0xff]
    %v114 = vld [vmem:[#allocation5 + $0xb8] sm:$0xff]
    %v115 = vld [vmem:[#allocation5 + $0xc0] sm:$0xff]
    %v116 = vld [vmem:[#allocation5 + $0xc8] sm:$0xff]
    %v117 = vld [vmem:[#allocation5 + $0xd0] sm:$0xff]
    %v118 = vld [vmem:[#allocation5 + $0xd8] sm:$0xff]
    %v119 = vld [vmem:[#allocation5 + $0xe0] sm:$0xff]
    %v120 = vld [vmem:[#allocation5 + $0xe8] sm:$0xff]
    %v121 = vld [vmem:[#allocation5 + $0xf0] sm:$0xff]
    %v122 = vld [vmem:[#allocation5 + $0xf8] sm:$0xff]
    %v123 = vld [vmem:[#allocation5 + $0x100] sm:$0xff]
    %v124 = vld [vmem:[#allocation5 + $0x108] sm:$0xff]
    %v125 = vld [vmem:[#allocation5 + $0x110] sm:$0xff]
    %v126 = vld [vmem:[#allocation5 + $0x118] sm:$0xff]
    %v127 = vld [vmem:[#allocation5 + $0x120] sm:$0xff]
    %v128 = vld [vmem:[#allocation5 + $0x128] sm:$0xff]
    %v129 = vld [vmem:[#allocation5 + $0x130] sm:$0xff]
    %v130 = vld [vmem:[#allocation5 + $0x138] sm:$0xff]
    %v131 = vld [vmem:[#allocation5 + $0x140] sm:$0xff]
    %v132 = vld [vmem:[#allocation5 + $0x148] sm:$0xff]
    %v133 = vld [vmem:[#allocation5 + $0x150] sm:$0xff]
    %v134 = vld [vmem:[#allocation5 + $0x158] sm:$0xff]
    %v135 = vld [vmem:[#allocation5 + $0x160] sm:$0xff]
    %v136 = vld [vmem:[#allocation5 + $0x168] sm:$0xff]
    %v137 = vld [vmem:[#allocation5 + $0x170] sm:$0xff]
    %v138 = vld [vmem:[#allocation5 + $0x178] sm:$0xff]
    %v139 = vld [vmem:[#allocation5 + $0x180] sm:$0xff]
    %v140 = vld [vmem:[#allocation5 + $0x188] sm:$0xff]
    %v141 = vld [vmem:[#allocation5 + $0x190] sm:$0xff]
    %v142 = vld [vmem:[#allocation5 + $0x198] sm:$0xff]
    %v143 = vld [vmem:[#allocation5 + $0x1a0] sm:$0xff]
    %v144 = vld [vmem:[#allocation5 + $0x1a8] sm:$0xff]
    %v145 = vld [vmem:[#allocation5 + $0x1b0] sm:$0xff]
    %v146 = vld [vmem:[#allocation5 + $0x1b8] sm:$0xff]
    %v147 = vld [vmem:[#allocation5 + $0x1c0] sm:$0xff]
    %v148 = vld [vmem:[#allocation5 + $0x1c8] sm:$0xff]
    %v149 = vld [vmem:[#allocation5 + $0x1d0] sm:$0xff]
    %v150 = vld [vmem:[#allocation5 + $0x1d8] sm:$0xff]
    %v151 = vld [vmem:[#allocation5 + $0x1e0] sm:$0xff]
    %v152 = vld [vmem:[#allocation5 + $0x1e8] sm:$0xff]
    %v153 = vld [vmem:[#allocation5 + $0x1f0] sm:$0xff]
    %v154 = vld [vmem:[#allocation5 + $0x1f8] sm:$0xff]
    %v155 = vld [vmem:[%s2] sm:$0xf]
    %v157 = vlaneseq
    %v158 = vshrl.u32 %v157, 7
    %v159 = vsub.s32 0, %v158
    %v160 = vrot.slane %v155, %v159
    %v161 = vlaneseq
    %v162 = vshrl.u32 %v161, 7
    %v163 = vsub.s32 1, %v162
    %v164 = vrot.slane %v155, %v163
    %v165 = vlaneseq
    %v166 = vshrl.u32 %v165, 7
    %v167 = vsub.s32 2, %v166
    %v168 = vrot.slane %v155, %v167
    %v169 = vlaneseq
    %v170 = vshrl.u32 %v169, 7
    %v171 = vsub.s32 3, %v170
    %v172 = vrot.slane %v155, %v171
    %v209 = vunpack.c.l.b16 %v59
    %v210 = vunpack.c.h.b16 %v59
    %v211 = vunpack.c.l.b16 %v60
    %v212 = vunpack.c.h.b16 %v60
    %v213 = vunpack.c.l.b16 %v61
    %v214 = vunpack.c.h.b16 %v61
    %v215 = vunpack.c.l.b16 %v62
    %v216 = vunpack.c.h.b16 %v62
    %v217 = vunpack.c.l.b16 %v63
    %v218 = vunpack.c.h.b16 %v63
    %v219 = vunpack.c.l.b16 %v64
    %v220 = vunpack.c.h.b16 %v64
    %v221 = vunpack.c.l.b16 %v65
    %v222 = vunpack.c.h.b16 %v65
    %v223 = vunpack.c.l.b16 %v66
    %v224 = vunpack.c.h.b16 %v66
    %v225 = vunpack.c.l.b16 %v67
    %v226 = vunpack.c.h.b16 %v67
    %v227 = vunpack.c.l.b16 %v68
    %v228 = vunpack.c.h.b16 %v68
    %v229 = vunpack.c.l.b16 %v69
    %v230 = vunpack.c.h.b16 %v69
    %v231 = vunpack.c.l.b16 %v70
    %v232 = vunpack.c.h.b16 %v70
    %v233 = vunpack.c.l.b16 %v71
    %v234 = vunpack.c.h.b16 %v71
    %v235 = vunpack.c.l.b16 %v72
    %v236 = vunpack.c.h.b16 %v72
    %v237 = vunpack.c.l.b16 %v73
    %v238 = vunpack.c.h.b16 %v73
    %v239 = vunpack.c.l.b16 %v74
    %v240 = vunpack.c.h.b16 %v74
    %v241 = vunpack.c.l.b16 %v75
    %v242 = vunpack.c.h.b16 %v75
    %v243 = vunpack.c.l.b16 %v76
    %v244 = vunpack.c.h.b16 %v76
    %v245 = vunpack.c.l.b16 %v77
    %v246 = vunpack.c.h.b16 %v77
    %v247 = vunpack.c.l.b16 %v78
    %v248 = vunpack.c.h.b16 %v78
    %v249 = vunpack.c.l.b16 %v79
    %v250 = vunpack.c.h.b16 %v79
    %v251 = vunpack.c.l.b16 %v80
    %v252 = vunpack.c.h.b16 %v80
    %v253 = vunpack.c.l.b16 %v81
    %v254 = vunpack.c.h.b16 %v81
    %v255 = vunpack.c.l.b16 %v82
    %v256 = vunpack.c.h.b16 %v82
    %v257 = vunpack.c.l.b16 %v83
    %v258 = vunpack.c.h.b16 %v83
    %v259 = vunpack.c.l.b16 %v84
    %v260 = vunpack.c.h.b16 %v84
    %v261 = vunpack.c.l.b16 %v85
    %v262 = vunpack.c.h.b16 %v85
    %v263 = vunpack.c.l.b16 %v86
    %v264 = vunpack.c.h.b16 %v86
    %v265 = vunpack.c.l.b16 %v87
    %v266 = vunpack.c.h.b16 %v87
    %v267 = vunpack.c.l.b16 %v88
    %v268 = vunpack.c.h.b16 %v88
    %v269 = vunpack.c.l.b16 %v89
    %v270 = vunpack.c.h.b16 %v89
    %v271 = vunpack.c.l.b16 %v90
    %v272 = vunpack.c.h.b16 %v90
    %v273 = vpack.c.b16 %v211, %v209
    %v274 = vpack.c.b16 %v212, %v210
    %v275 = vpack.c.b16 %v215, %v213
    %v276 = vpack.c.b16 %v216, %v214
    %v277 = vpack.c.b16 %v219, %v217
    %v278 = vpack.c.b16 %v220, %v218
    %v279 = vpack.c.b16 %v223, %v221
    %v280 = vpack.c.b16 %v224, %v222
    %v281 = vpack.c.b16 %v227, %v225
    %v282 = vpack.c.b16 %v228, %v226
    %v283 = vpack.c.b16 %v231, %v229
    %v284 = vpack.c.b16 %v232, %v230
    %v285 = vpack.c.b16 %v235, %v233
    %v286 = vpack.c.b16 %v236, %v234
    %v287 = vpack.c.b16 %v239, %v237
    %v288 = vpack.c.b16 %v240, %v238
    %v289 = vpack.c.b16 %v243, %v241
    %v290 = vpack.c.b16 %v244, %v242
    %v291 = vpack.c.b16 %v247, %v245
    %v292 = vpack.c.b16 %v248, %v246
    %v293 = vpack.c.b16 %v251, %v249
    %v294 = vpack.c.b16 %v252, %v250
    %v295 = vpack.c.b16 %v255, %v253
    %v296 = vpack.c.b16 %v256, %v254
    %v297 = vpack.c.b16 %v259, %v257
    %v298 = vpack.c.b16 %v260, %v258
    %v299 = vpack.c.b16 %v263, %v261
    %v300 = vpack.c.b16 %v264, %v262
    %v301 = vpack.c.b16 %v267, %v265
    %v302 = vpack.c.b16 %v268, %v266
    %v303 = vpack.c.b16 %v271, %v269
    %v304 = vpack.c.b16 %v272, %v270
    %v401 = vunpack.c.l.b16 %v91
    %v402 = vunpack.c.h.b16 %v91
    %v403 = vunpack.c.l.b16 %v92
    %v404 = vunpack.c.h.b16 %v92
    %v405 = vunpack.c.l.b16 %v93
    %v406 = vunpack.c.h.b16 %v93
    %v407 = vunpack.c.l.b16 %v94
    %v408 = vunpack.c.h.b16 %v94
    %v409 = vunpack.c.l.b16 %v95
    %v410 = vunpack.c.h.b16 %v95
    %v411 = vunpack.c.l.b16 %v96
    %v412 = vunpack.c.h.b16 %v96
    %v413 = vunpack.c.l.b16 %v97
    %v414 = vunpack.c.h.b16 %v97
    %v415 = vunpack.c.l.b16 %v98
    %v416 = vunpack.c.h.b16 %v98
    %v417 = vunpack.c.l.b16 %v99
    %v418 = vunpack.c.h.b16 %v99
    %v419 = vunpack.c.l.b16 %v100
    %v420 = vunpack.c.h.b16 %v100
    %v421 = vunpack.c.l.b16 %v101
    %v422 = vunpack.c.h.b16 %v101
    %v423 = vunpack.c.l.b16 %v102
    %v424 = vunpack.c.h.b16 %v102
    %v425 = vunpack.c.l.b16 %v103
    %v426 = vunpack.c.h.b16 %v103
    %v427 = vunpack.c.l.b16 %v104
    %v428 = vunpack.c.h.b16 %v104
    %v429 = vunpack.c.l.b16 %v105
    %v430 = vunpack.c.h.b16 %v105
    %v431 = vunpack.c.l.b16 %v106
    %v432 = vunpack.c.h.b16 %v106
    %v433 = vunpack.c.l.b16 %v107
    %v434 = vunpack.c.h.b16 %v107
    %v435 = vunpack.c.l.b16 %v108
    %v436 = vunpack.c.h.b16 %v108
    %v437 = vunpack.c.l.b16 %v109
    %v438 = vunpack.c.h.b16 %v109
    %v439 = vunpack.c.l.b16 %v110
    %v440 = vunpack.c.h.b16 %v110
    %v441 = vunpack.c.l.b16 %v111
    %v442 = vunpack.c.h.b16 %v111
    %v443 = vunpack.c.l.b16 %v112
    %v444 = vunpack.c.h.b16 %v112
    %v445 = vunpack.c.l.b16 %v113
    %v446 = vunpack.c.h.b16 %v113
    %v447 = vunpack.c.l.b16 %v114
    %v448 = vunpack.c.h.b16 %v114
    %v449 = vunpack.c.l.b16 %v115
    %v450 = vunpack.c.h.b16 %v115
    %v451 = vunpack.c.l.b16 %v116
    %v452 = vunpack.c.h.b16 %v116
    %v453 = vunpack.c.l.b16 %v117
    %v454 = vunpack.c.h.b16 %v117
    %v455 = vunpack.c.l.b16 %v118
    %v456 = vunpack.c.h.b16 %v118
    %v457 = vunpack.c.l.b16 %v119
    %v458 = vunpack.c.h.b16 %v119
    %v459 = vunpack.c.l.b16 %v120
    %v460 = vunpack.c.h.b16 %v120
    %v461 = vunpack.c.l.b16 %v121
    %v462 = vunpack.c.h.b16 %v121
    %v463 = vunpack.c.l.b16 %v122
    %v464 = vunpack.c.h.b16 %v122
    %v465 = vunpack.c.l.b16 %v123
    %v466 = vunpack.c.h.b16 %v123
    %v467 = vunpack.c.l.b16 %v124
    %v468 = vunpack.c.h.b16 %v124
    %v469 = vunpack.c.l.b16 %v125
    %v470 = vunpack.c.h.b16 %v125
    %v471 = vunpack.c.l.b16 %v126
    %v472 = vunpack.c.h.b16 %v126
    %v473 = vunpack.c.l.b16 %v127
    %v474 = vunpack.c.h.b16 %v127
    %v475 = vunpack.c.l.b16 %v128
    %v476 = vunpack.c.h.b16 %v128
    %v477 = vunpack.c.l.b16 %v129
    %v478 = vunpack.c.h.b16 %v129
    %v479 = vunpack.c.l.b16 %v130
    %v480 = vunpack.c.h.b16 %v130
    %v481 = vunpack.c.l.b16 %v131
    %v482 = vunpack.c.h.b16 %v131
    %v483 = vunpack.c.l.b16 %v132
    %v484 = vunpack.c.h.b16 %v132
    %v485 = vunpack.c.l.b16 %v133
    %v486 = vunpack.c.h.b16 %v133
    %v487 = vunpack.c.l.b16 %v134
    %v488 = vunpack.c.h.b16 %v134
    %v489 = vunpack.c.l.b16 %v135
    %v490 = vunpack.c.h.b16 %v135
    %v491 = vunpack.c.l.b16 %v136
    %v492 = vunpack.c.h.b16 %v136
    %v493 = vunpack.c.l.b16 %v137
    %v494 = vunpack.c.h.b16 %v137
    %v495 = vunpack.c.l.b16 %v138
    %v496 = vunpack.c.h.b16 %v138
    %v497 = vunpack.c.l.b16 %v139
    %v498 = vunpack.c.h.b16 %v139
    %v499 = vunpack.c.l.b16 %v140
    %v500 = vunpack.c.h.b16 %v140
    %v501 = vunpack.c.l.b16 %v141
    %v502 = vunpack.c.h.b16 %v141
    %v503 = vunpack.c.l.b16 %v142
    %v504 = vunpack.c.h.b16 %v142
    %v505 = vunpack.c.l.b16 %v143
    %v506 = vunpack.c.h.b16 %v143
    %v507 = vunpack.c.l.b16 %v144
    %v508 = vunpack.c.h.b16 %v144
    %v509 = vunpack.c.l.b16 %v145
    %v510 = vunpack.c.h.b16 %v145
    %v511 = vunpack.c.l.b16 %v146
    %v512 = vunpack.c.h.b16 %v146
    %v513 = vunpack.c.l.b16 %v147
    %v514 = vunpack.c.h.b16 %v147
    %v515 = vunpack.c.l.b16 %v148
    %v516 = vunpack.c.h.b16 %v148
    %v517 = vunpack.c.l.b16 %v149
    %v518 = vunpack.c.h.b16 %v149
    %v519 = vunpack.c.l.b16 %v150
    %v520 = vunpack.c.h.b16 %v150
    %v521 = vunpack.c.l.b16 %v151
    %v522 = vunpack.c.h.b16 %v151
    %v523 = vunpack.c.l.b16 %v152
    %v524 = vunpack.c.h.b16 %v152
    %v525 = vunpack.c.l.b16 %v153
    %v526 = vunpack.c.h.b16 %v153
    %v527 = vunpack.c.l.b16 %v154
    %v528 = vunpack.c.h.b16 %v154
    %v529 = vpack.c.b16 %v405, %v401
    %v530 = vpack.c.b16 %v406, %v402
    %v531 = vpack.c.b16 %v407, %v403
    %v532 = vpack.c.b16 %v408, %v404
    %v533 = vpack.c.b16 %v413, %v409
    %v534 = vpack.c.b16 %v414, %v410
    %v535 = vpack.c.b16 %v415, %v411
    %v536 = vpack.c.b16 %v416, %v412
    %v537 = vpack.c.b16 %v421, %v417
    %v538 = vpack.c.b16 %v422, %v418
    %v539 = vpack.c.b16 %v423, %v419
    %v540 = vpack.c.b16 %v424, %v420
    %v541 = vpack.c.b16 %v429, %v425
    %v542 = vpack.c.b16 %v430, %v426
    %v543 = vpack.c.b16 %v431, %v427
    %v544 = vpack.c.b16 %v432, %v428
    %v545 = vpack.c.b16 %v437, %v433
    %v546 = vpack.c.b16 %v438, %v434
    %v547 = vpack.c.b16 %v439, %v435
    %v548 = vpack.c.b16 %v440, %v436
    %v549 = vpack.c.b16 %v445, %v441
    %v550 = vpack.c.b16 %v446, %v442
    %v551 = vpack.c.b16 %v447, %v443
    %v552 = vpack.c.b16 %v448, %v444
    %v553 = vpack.c.b16 %v453, %v449
    %v554 = vpack.c.b16 %v454, %v450
    %v555 = vpack.c.b16 %v455, %v451
    %v556 = vpack.c.b16 %v456, %v452
    %v557 = vpack.c.b16 %v461, %v457
    %v558 = vpack.c.b16 %v462, %v458
    %v559 = vpack.c.b16 %v463, %v459
    %v560 = vpack.c.b16 %v464, %v460
    %v561 = vpack.c.b16 %v469, %v465
    %v562 = vpack.c.b16 %v470, %v466
    %v563 = vpack.c.b16 %v471, %v467
    %v564 = vpack.c.b16 %v472, %v468
    %v565 = vpack.c.b16 %v477, %v473
    %v566 = vpack.c.b16 %v478, %v474
    %v567 = vpack.c.b16 %v479, %v475
    %v568 = vpack.c.b16 %v480, %v476
    %v569 = vpack.c.b16 %v485, %v481
    %v570 = vpack.c.b16 %v486, %v482
    %v571 = vpack.c.b16 %v487, %v483
    %v572 = vpack.c.b16 %v488, %v484
    %v573 = vpack.c.b16 %v493, %v489
    %v574 = vpack.c.b16 %v494, %v490
    %v575 = vpack.c.b16 %v495, %v491
    %v576 = vpack.c.b16 %v496, %v492
    %v577 = vpack.c.b16 %v501, %v497
    %v578 = vpack.c.b16 %v502, %v498
    %v579 = vpack.c.b16 %v503, %v499
    %v580 = vpack.c.b16 %v504, %v500
    %v581 = vpack.c.b16 %v509, %v505
    %v582 = vpack.c.b16 %v510, %v506
    %v583 = vpack.c.b16 %v511, %v507
    %v584 = vpack.c.b16 %v512, %v508
    %v585 = vpack.c.b16 %v517, %v513
    %v586 = vpack.c.b16 %v518, %v514
    %v587 = vpack.c.b16 %v519, %v515
    %v588 = vpack.c.b16 %v520, %v516
    %v589 = vpack.c.b16 %v525, %v521
    %v590 = vpack.c.b16 %v526, %v522
    %v591 = vpack.c.b16 %v527, %v523
    %v592 = vpack.c.b16 %v528, %v524
    %657 = vmatprep.subr.bf16.mxu0 %v530
    %658 = vmatpush1.bf16.msra.mxu0 %v529
    %659 = vmatprep.subr.bf16.mxu0 %v534
    %660 = vmatpush1.bf16.msra.mxu0 %v533
    %661 = vmatprep.subr.bf16.mxu0 %v538
    %662 = vmatpush1.bf16.msra.mxu0 %v537
    %663 = vmatprep.subr.bf16.mxu0 %v542
    %664 = vmatpush1.bf16.msra.mxu0 %v541
    %665 = vmatprep.subr.bf16.mxu0 %v546
    %666 = vmatpush1.bf16.msra.mxu0 %v545
    %667 = vmatprep.subr.bf16.mxu0 %v550
    %668 = vmatpush1.bf16.msra.mxu0 %v549
    %669 = vmatprep.subr.bf16.mxu0 %v554
    %670 = vmatpush1.bf16.msra.mxu0 %v553
    %671 = vmatprep.subr.bf16.mxu0 %v558
    %672 = vmatpush1.bf16.msra.mxu0 %v557
    %673 = vmatprep.subr.bf16.mxu0 %v562
    %674 = vmatpush1.bf16.msra.mxu0 %v561
    %675 = vmatprep.subr.bf16.mxu0 %v566
    %676 = vmatpush1.bf16.msra.mxu0 %v565
    %677 = vmatprep.subr.bf16.mxu0 %v570
    %678 = vmatpush1.bf16.msra.mxu0 %v569
    %679 = vmatprep.subr.bf16.mxu0 %v574
    %680 = vmatpush1.bf16.msra.mxu0 %v573
    %681 = vmatprep.subr.bf16.mxu0 %v578
    %682 = vmatpush1.bf16.msra.mxu0 %v577
    %683 = vmatprep.subr.bf16.mxu0 %v582
    %684 = vmatpush1.bf16.msra.mxu0 %v581
    %685 = vmatprep.subr.bf16.mxu0 %v586
    %686 = vmatpush1.bf16.msra.mxu0 %v585
    %687 = vmatprep.subr.bf16.mxu0 %v590
    %688 = vmatpush1.bf16.msra.mxu0 %v589
    %689 = vmatprep.mubr.bf16.mxu0 %v274
    %690 = vmatmul.mubr.bf16.gmra.mrb[0].mxu0 %v273
    %v691 = vpop.f32.mrb[0].mxu0
    %v692 = vadd.f32 %v160, %v691
    %v693 = vpop.f32.mrb[0].mxu0
    %v694 = vadd.f32 %v164, %v693
    %v695 = vpop.f32.mrb[0].mxu0
    %v696 = vadd.f32 %v160, %v695
    %v697 = vpop.f32.mrb[0].mxu0
    %v698 = vadd.f32 %v164, %v697
    %699 = vmatprep.mubr.bf16.mxu0 %v276
    %700 = vmatmul.mubr.bf16.gmra.mrb[0].mxu0 %v275
    %v701 = vpop.f32.mrb[0].mxu0
    %v702 = vadd.f32 %v160, %v701
    %v703 = vpop.f32.mrb[0].mxu0
    %v704 = vadd.f32 %v164, %v703
    %v705 = vpop.f32.mrb[0].mxu0
    %v706 = vadd.f32 %v160, %v705
    %v707 = vpop.f32.mrb[0].mxu0
    %v708 = vadd.f32 %v164, %v707
    %709 = vmatprep.mubr.bf16.mxu0 %v278
    %710 = vmatmul.mubr.bf16.gmra.mrb[0].mxu0 %v277
    %v711 = vpop.f32.mrb[0].mxu0
    %v712 = vadd.f32 %v160, %v711
    %v713 = vpop.f32.mrb[0].mxu0
    %v714 = vadd.f32 %v164, %v713
    %v715 = vpop.f32.mrb[0].mxu0
    %v716 = vadd.f32 %v160, %v715
    %v717 = vpop.f32.mrb[0].mxu0
    %v718 = vadd.f32 %v164, %v717
    %719 = vmatprep.mubr.bf16.mxu0 %v280
    %720 = vmatmul.mubr.bf16.gmra.mrb[0].mxu0 %v279
    %v721 = vpop.f32.mrb[0].mxu0
    %v722 = vadd.f32 %v160, %v721
    %v723 = vpop.f32.mrb[0].mxu0
    %v724 = vadd.f32 %v164, %v723
    %v725 = vpop.f32.mrb[0].mxu0
    %v726 = vadd.f32 %v160, %v725
    %v727 = vpop.f32.mrb[0].mxu0
    %v728 = vadd.f32 %v164, %v727
    %729 = vmatprep.mubr.bf16.mxu0 %v282
    %730 = vmatmul.mubr.bf16.gmra.mrb[0].mxu0 %v281
    %v731 = vpop.f32.mrb[0].mxu0
    %v732 = vadd.f32 %v160, %v731
    %v733 = vpop.f32.mrb[0].mxu0
    %v734 = vadd.f32 %v164, %v733
    %v735 = vpop.f32.mrb[0].mxu0
    %v736 = vadd.f32 %v160, %v735
    %v737 = vpop.f32.mrb[0].mxu0
    %v738 = vadd.f32 %v164, %v737
    %739 = vmatprep.mubr.bf16.mxu0 %v284
    %740 = vmatmul.mubr.bf16.gmra.mrb[0].mxu0 %v283
    %v741 = vpop.f32.mrb[0].mxu0
    %v742 = vadd.f32 %v160, %v741
    %v743 = vpop.f32.mrb[0].mxu0
    %v744 = vadd.f32 %v164, %v743
    %v745 = vpop.f32.mrb[0].mxu0
    %v746 = vadd.f32 %v160, %v745
    %v747 = vpop.f32.mrb[0].mxu0
    %v748 = vadd.f32 %v164, %v747
    %749 = vmatprep.mubr.bf16.mxu0 %v286
    %750 = vmatmul.mubr.bf16.gmra.mrb[0].mxu0 %v285
    %v751 = vpop.f32.mrb[0].mxu0
    %v752 = vadd.f32 %v160, %v751
    %v753 = vpop.f32.mrb[0].mxu0
    %v754 = vadd.f32 %v164, %v753
    %v755 = vpop.f32.mrb[0].mxu0
    %v756 = vadd.f32 %v160, %v755
    %v757 = vpop.f32.mrb[0].mxu0
    %v758 = vadd.f32 %v164, %v757
    %759 = vmatprep.mubr.bf16.mxu0 %v288
    %760 = vmatmul.mubr.bf16.gmra.mrb[0].mxu0 %v287
    %v761 = vpop.f32.mrb[0].mxu0
    %v762 = vadd.f32 %v160, %v761
    %v763 = vpop.f32.mrb[0].mxu0
    %v764 = vadd.f32 %v164, %v763
    %v765 = vpop.f32.mrb[0].mxu0
    %v766 = vadd.f32 %v160, %v765
    %v767 = vpop.f32.mrb[0].mxu0
    %v768 = vadd.f32 %v164, %v767
    %769 = vmatprep.mubr.bf16.mxu0 %v290
    %770 = vmatmul.mubr.bf16.gmra.mrb[0].mxu0 %v289
    %v771 = vpop.f32.mrb[0].mxu0
    %v772 = vadd.f32 %v160, %v771
    %v773 = vpop.f32.mrb[0].mxu0
    %v774 = vadd.f32 %v164, %v773
    %v775 = vpop.f32.mrb[0].mxu0
    %v776 = vadd.f32 %v160, %v775
    %v777 = vpop.f32.mrb[0].mxu0
    %v778 = vadd.f32 %v164, %v777
    %779 = vmatprep.mubr.bf16.mxu0 %v292
    %780 = vmatmul.mubr.bf16.gmra.mrb[0].mxu0 %v291
    %v781 = vpop.f32.mrb[0].mxu0
    %v782 = vadd.f32 %v160, %v781
    %v783 = vpop.f32.mrb[0].mxu0
    %v784 = vadd.f32 %v164, %v783
    %v785 = vpop.f32.mrb[0].mxu0
    %v786 = vadd.f32 %v160, %v785
    %v787 = vpop.f32.mrb[0].mxu0
    %v788 = vadd.f32 %v164, %v787
    %789 = vmatprep.mubr.bf16.mxu0 %v294
    %790 = vmatmul.mubr.bf16.gmra.mrb[0].mxu0 %v293
    %v791 = vpop.f32.mrb[0].mxu0
    %v792 = vadd.f32 %v160, %v791
    %v793 = vpop.f32.mrb[0].mxu0
    %v794 = vadd.f32 %v164, %v793
    %v795 = vpop.f32.mrb[0].mxu0
    %v796 = vadd.f32 %v160, %v795
    %v797 = vpop.f32.mrb[0].mxu0
    %v798 = vadd.f32 %v164, %v797
    %799 = vmatprep.mubr.bf16.mxu0 %v296
    %800 = vmatmul.mubr.bf16.gmra.mrb[0].mxu0 %v295
    %v801 = vpop.f32.mrb[0].mxu0
    %v802 = vadd.f32 %v160, %v801
    %v803 = vpop.f32.mrb[0].mxu0
    %v804 = vadd.f32 %v164, %v803
    %v805 = vpop.f32.mrb[0].mxu0
    %v806 = vadd.f32 %v160, %v805
    %v807 = vpop.f32.mrb[0].mxu0
    %v808 = vadd.f32 %v164, %v807
    %809 = vmatprep.mubr.bf16.mxu0 %v298
    %810 = vmatmul.mubr.bf16.gmra.mrb[0].mxu0 %v297
    %v811 = vpop.f32.mrb[0].mxu0
    %v812 = vadd.f32 %v160, %v811
    %v813 = vpop.f32.mrb[0].mxu0
    %v814 = vadd.f32 %v164, %v813
    %v815 = vpop.f32.mrb[0].mxu0
    %v816 = vadd.f32 %v160, %v815
    %v817 = vpop.f32.mrb[0].mxu0
    %v818 = vadd.f32 %v164, %v817
    %819 = vmatprep.mubr.bf16.mxu0 %v300
    %820 = vmatmul.mubr.bf16.gmra.mrb[0].mxu0 %v299
    %v821 = vpop.f32.mrb[0].mxu0
    %v822 = vadd.f32 %v160, %v821
    %v823 = vpop.f32.mrb[0].mxu0
    %v824 = vadd.f32 %v164, %v823
    %v825 = vpop.f32.mrb[0].mxu0
    %v826 = vadd.f32 %v160, %v825
    %v827 = vpop.f32.mrb[0].mxu0
    %v828 = vadd.f32 %v164, %v827
    %829 = vmatprep.mubr.bf16.mxu0 %v302
    %830 = vmatmul.mubr.bf16.gmra.mrb[0].mxu0 %v301
    %v831 = vpop.f32.mrb[0].mxu0
    %v832 = vadd.f32 %v160, %v831
    %v833 = vpop.f32.mrb[0].mxu0
    %v834 = vadd.f32 %v164, %v833
    %v835 = vpop.f32.mrb[0].mxu0
    %v836 = vadd.f32 %v160, %v835
    %v837 = vpop.f32.mrb[0].mxu0
    %v838 = vadd.f32 %v164, %v837
    %839 = vmatprep.mubr.bf16.mxu0 %v304
    %840 = vmatmul.mubr.bf16.gmra.mrb[0].mxu0 %v303
    %v841 = vpop.f32.mrb[0].mxu0
    %v842 = vadd.f32 %v160, %v841
    %v843 = vpop.f32.mrb[0].mxu0
    %v844 = vadd.f32 %v164, %v843
    %v845 = vpop.f32.mrb[0].mxu0
    %v846 = vadd.f32 %v160, %v845
    %v847 = vpop.f32.mrb[0].mxu0
    %v848 = vadd.f32 %v164, %v847
    %849 = vdwg.mxu0
    %850 = vmatprep.subr.bf16.mxu0 %v532
    %851 = vmatpush1.bf16.msra.mxu0 %v531
    %852 = vmatprep.subr.bf16.mxu0 %v536
    %853 = vmatpush1.bf16.msra.mxu0 %v535
    %854 = vmatprep.subr.bf16.mxu0 %v540
    %855 = vmatpush1.bf16.msra.mxu0 %v539
    %856 = vmatprep.subr.bf16.mxu0 %v544
    %857 = vmatpush1.bf16.msra.mxu0 %v543
    %858 = vmatprep.subr.bf16.mxu0 %v548
    %859 = vmatpush1.bf16.msra.mxu0 %v547
    %860 = vmatprep.subr.bf16.mxu0 %v552
    %861 = vmatpush1.bf16.msra.mxu0 %v551
    %862 = vmatprep.subr.bf16.mxu0 %v556
    %863 = vmatpush1.bf16.msra.mxu0 %v555
    %864 = vmatprep.subr.bf16.mxu0 %v560
    %865 = vmatpush1.bf16.msra.mxu0 %v559
    %866 = vmatprep.subr.bf16.mxu0 %v564
    %867 = vmatpush1.bf16.msra.mxu0 %v563
    %868 = vmatprep.subr.bf16.mxu0 %v568
    %869 = vmatpush1.bf16.msra.mxu0 %v567
    %870 = vmatprep.subr.bf16.mxu0 %v572
    %871 = vmatpush1.bf16.msra.mxu0 %v571
    %872 = vmatprep.subr.bf16.mxu0 %v576
    %873 = vmatpush1.bf16.msra.mxu0 %v575
    %874 = vmatprep.subr.bf16.mxu0 %v580
    %875 = vmatpush1.bf16.msra.mxu0 %v579
    %876 = vmatprep.subr.bf16.mxu0 %v584
    %877 = vmatpush1.bf16.msra.mxu0 %v583
    %878 = vmatprep.subr.bf16.mxu0 %v588
    %879 = vmatpush1.bf16.msra.mxu0 %v587
    %880 = vmatprep.subr.bf16.mxu0 %v592
    %881 = vmatpush1.bf16.msra.mxu0 %v591
    %882 = vmatprep.mubr.bf16.mxu0 %v274
    %883 = vmatmul.mubr.bf16.gmra.mrb[0].mxu0 %v273
    %v884 = vpop.f32.mrb[0].mxu0
    %v885 = vadd.f32 %v168, %v884
    %v886 = vpop.f32.mrb[0].mxu0
    %v887 = vadd.f32 %v172, %v886
    %v888 = vpop.f32.mrb[0].mxu0
    %v889 = vadd.f32 %v168, %v888
    %v890 = vpop.f32.mrb[0].mxu0
    %v891 = vadd.f32 %v172, %v890
    %892 = vmatprep.mubr.bf16.mxu0 %v276
    %893 = vmatmul.mubr.bf16.gmra.mrb[0].mxu0 %v275
    %v894 = vpop.f32.mrb[0].mxu0
    %v895 = vadd.f32 %v168, %v894
    %v896 = vpop.f32.mrb[0].mxu0
    %v897 = vadd.f32 %v172, %v896
    %v898 = vpop.f32.mrb[0].mxu0
    %v899 = vadd.f32 %v168, %v898
    %v900 = vpop.f32.mrb[0].mxu0
    %v901 = vadd.f32 %v172, %v900
    %902 = vmatprep.mubr.bf16.mxu0 %v278
    %903 = vmatmul.mubr.bf16.gmra.mrb[0].mxu0 %v277
    %v904 = vpop.f32.mrb[0].mxu0
    %v905 = vadd.f32 %v168, %v904
    %v906 = vpop.f32.mrb[0].mxu0
    %v907 = vadd.f32 %v172, %v906
    %v908 = vpop.f32.mrb[0].mxu0
    %v909 = vadd.f32 %v168, %v908
    %v910 = vpop.f32.mrb[0].mxu0
    %v911 = vadd.f32 %v172, %v910
    %912 = vmatprep.mubr.bf16.mxu0 %v280
    %913 = vmatmul.mubr.bf16.gmra.mrb[0].mxu0 %v279
    %v914 = vpop.f32.mrb[0].mxu0
    %v915 = vadd.f32 %v168, %v914
    %v916 = vpop.f32.mrb[0].mxu0
    %v917 = vadd.f32 %v172, %v916
    %v918 = vpop.f32.mrb[0].mxu0
    %v919 = vadd.f32 %v168, %v918
    %v920 = vpop.f32.mrb[0].mxu0
    %v921 = vadd.f32 %v172, %v920
    %922 = vmatprep.mubr.bf16.mxu0 %v282
    %923 = vmatmul.mubr.bf16.gmra.mrb[0].mxu0 %v281
    %v924 = vpop.f32.mrb[0].mxu0
    %v925 = vadd.f32 %v168, %v924
    %v926 = vpop.f32.mrb[0].mxu0
    %v927 = vadd.f32 %v172, %v926
    %v928 = vpop.f32.mrb[0].mxu0
    %v929 = vadd.f32 %v168, %v928
    %v930 = vpop.f32.mrb[0].mxu0
    %v931 = vadd.f32 %v172, %v930
    %932 = vmatprep.mubr.bf16.mxu0 %v284
    %933 = vmatmul.mubr.bf16.gmra.mrb[0].mxu0 %v283
    %v934 = vpop.f32.mrb[0].mxu0
    %v935 = vadd.f32 %v168, %v934
    %v936 = vpop.f32.mrb[0].mxu0
    %v937 = vadd.f32 %v172, %v936
    %v938 = vpop.f32.mrb[0].mxu0
    %v939 = vadd.f32 %v168, %v938
    %v940 = vpop.f32.mrb[0].mxu0
    %v941 = vadd.f32 %v172, %v940
    %942 = vmatprep.mubr.bf16.mxu0 %v286
    %943 = vmatmul.mubr.bf16.gmra.mrb[0].mxu0 %v285
    %v944 = vpop.f32.mrb[0].mxu0
    %v945 = vadd.f32 %v168, %v944
    %v946 = vpop.f32.mrb[0].mxu0
    %v947 = vadd.f32 %v172, %v946
    %v948 = vpop.f32.mrb[0].mxu0
    %v949 = vadd.f32 %v168, %v948
    %v950 = vpop.f32.mrb[0].mxu0
    %v951 = vadd.f32 %v172, %v950
    %952 = vmatprep.mubr.bf16.mxu0 %v288
    %953 = vmatmul.mubr.bf16.gmra.mrb[0].mxu0 %v287
    %v954 = vpop.f32.mrb[0].mxu0
    %v955 = vadd.f32 %v168, %v954
    %v956 = vpop.f32.mrb[0].mxu0
    %v957 = vadd.f32 %v172, %v956
    %v958 = vpop.f32.mrb[0].mxu0
    %v959 = vadd.f32 %v168, %v958
    %v960 = vpop.f32.mrb[0].mxu0
    %v961 = vadd.f32 %v172, %v960
    %962 = vmatprep.mubr.bf16.mxu0 %v290
    %963 = vmatmul.mubr.bf16.gmra.mrb[0].mxu0 %v289
    %v964 = vpop.f32.mrb[0].mxu0
    %v965 = vadd.f32 %v168, %v964
    %v966 = vpop.f32.mrb[0].mxu0
    %v967 = vadd.f32 %v172, %v966
    %v968 = vpop.f32.mrb[0].mxu0
    %v969 = vadd.f32 %v168, %v968
    %v970 = vpop.f32.mrb[0].mxu0
    %v971 = vadd.f32 %v172, %v970
    %972 = vmatprep.mubr.bf16.mxu0 %v292
    %973 = vmatmul.mubr.bf16.gmra.mrb[0].mxu0 %v291
    %v974 = vpop.f32.mrb[0].mxu0
    %v975 = vadd.f32 %v168, %v974
    %v976 = vpop.f32.mrb[0].mxu0
    %v977 = vadd.f32 %v172, %v976
    %v978 = vpop.f32.mrb[0].mxu0
    %v979 = vadd.f32 %v168, %v978
    %v980 = vpop.f32.mrb[0].mxu0
    %v981 = vadd.f32 %v172, %v980
    %982 = vmatprep.mubr.bf16.mxu0 %v294
    %983 = vmatmul.mubr.bf16.gmra.mrb[0].mxu0 %v293
    %v984 = vpop.f32.mrb[0].mxu0
    %v985 = vadd.f32 %v168, %v984
    %v986 = vpop.f32.mrb[0].mxu0
    %v987 = vadd.f32 %v172, %v986
    %v988 = vpop.f32.mrb[0].mxu0
    %v989 = vadd.f32 %v168, %v988
    %v990 = vpop.f32.mrb[0].mxu0
    %v991 = vadd.f32 %v172, %v990
    %992 = vmatprep.mubr.bf16.mxu0 %v296
    %993 = vmatmul.mubr.bf16.gmra.mrb[0].mxu0 %v295
    %v994 = vpop.f32.mrb[0].mxu0
    %v995 = vadd.f32 %v168, %v994
    %v996 = vpop.f32.mrb[0].mxu0
    %v997 = vadd.f32 %v172, %v996
    %v998 = vpop.f32.mrb[0].mxu0
    %v999 = vadd.f32 %v168, %v998
    %v1000 = vpop.f32.mrb[0].mxu0
    %v1001 = vadd.f32 %v172, %v1000
    %1002 = vmatprep.mubr.bf16.mxu0 %v298
    %1003 = vmatmul.mubr.bf16.gmra.mrb[0].mxu0 %v297
    %v1004 = vpop.f32.mrb[0].mxu0
    %v1005 = vadd.f32 %v168, %v1004
    %v1006 = vpop.f32.mrb[0].mxu0
    %v1007 = vadd.f32 %v172, %v1006
    %v1008 = vpop.f32.mrb[0].mxu0
    %v1009 = vadd.f32 %v168, %v1008
    %v1010 = vpop.f32.mrb[0].mxu0
    %v1011 = vadd.f32 %v172, %v1010
    %1012 = vmatprep.mubr.bf16.mxu0 %v300
    %1013 = vmatmul.mubr.bf16.gmra.mrb[0].mxu0 %v299
    %v1014 = vpop.f32.mrb[0].mxu0
    %v1015 = vadd.f32 %v168, %v1014
    %v1016 = vpop.f32.mrb[0].mxu0
    %v1017 = vadd.f32 %v172, %v1016
    %v1018 = vpop.f32.mrb[0].mxu0
    %v1019 = vadd.f32 %v168, %v1018
    %v1020 = vpop.f32.mrb[0].mxu0
    %v1021 = vadd.f32 %v172, %v1020
    %1022 = vmatprep.mubr.bf16.mxu0 %v302
    %1023 = vmatmul.mubr.bf16.gmra.mrb[0].mxu0 %v301
    %v1024 = vpop.f32.mrb[0].mxu0
    %v1025 = vadd.f32 %v168, %v1024
    %v1026 = vpop.f32.mrb[0].mxu0
    %v1027 = vadd.f32 %v172, %v1026
    %v1028 = vpop.f32.mrb[0].mxu0
    %v1029 = vadd.f32 %v168, %v1028
    %v1030 = vpop.f32.mrb[0].mxu0
    %v1031 = vadd.f32 %v172, %v1030
    %1032 = vmatprep.mubr.bf16.mxu0 %v304
    %1033 = vmatmul.mubr.bf16.gmra.mrb[0].mxu0 %v303
    %v1034 = vpop.f32.mrb[0].mxu0
    %v1035 = vadd.f32 %v168, %v1034
    %v1036 = vpop.f32.mrb[0].mxu0
    %v1037 = vadd.f32 %v172, %v1036
    %v1038 = vpop.f32.mrb[0].mxu0
    %v1039 = vadd.f32 %v168, %v1038
    %v1040 = vpop.f32.mrb[0].mxu0
    %v1041 = vadd.f32 %v172, %v1040
    %1042 = vdwg.mxu0
    %v1043 = vmax.f32 %v692, 0.0
    %v1044 = vmax.f32 %v694, 0.0
    %v1045 = vmax.f32 %v885, 0.0
    %v1046 = vmax.f32 %v887, 0.0
    %v1047 = vmax.f32 %v696, 0.0
    %v1048 = vmax.f32 %v698, 0.0
    %v1049 = vmax.f32 %v889, 0.0
    %v1050 = vmax.f32 %v891, 0.0
    %v1051 = vmax.f32 %v702, 0.0
    %v1052 = vmax.f32 %v704, 0.0
    %v1053 = vmax.f32 %v895, 0.0
    %v1054 = vmax.f32 %v897, 0.0
    %v1055 = vmax.f32 %v706, 0.0
    %v1056 = vmax.f32 %v708, 0.0
    %v1057 = vmax.f32 %v899, 0.0
    %v1058 = vmax.f32 %v901, 0.0
    %v1059 = vmax.f32 %v712, 0.0
    %v1060 = vmax.f32 %v714, 0.0
    %v1061 = vmax.f32 %v905, 0.0
    %v1062 = vmax.f32 %v907, 0.0
    %v1063 = vmax.f32 %v716, 0.0
    %v1064 = vmax.f32 %v718, 0.0
    %v1065 = vmax.f32 %v909, 0.0
    %v1066 = vmax.f32 %v911, 0.0
    %v1067 = vmax.f32 %v722, 0.0
    %v1068 = vmax.f32 %v724, 0.0
    %v1069 = vmax.f32 %v915, 0.0
    %v1070 = vmax.f32 %v917, 0.0
    %v1071 = vmax.f32 %v726, 0.0
    %v1072 = vmax.f32 %v728, 0.0
    %v1073 = vmax.f32 %v919, 0.0
    %v1074 = vmax.f32 %v921, 0.0
    %v1075 = vmax.f32 %v732, 0.0
    %v1076 = vmax.f32 %v734, 0.0
    %v1077 = vmax.f32 %v925, 0.0
    %v1078 = vmax.f32 %v927, 0.0
    %v1079 = vmax.f32 %v736, 0.0
    %v1080 = vmax.f32 %v738, 0.0
    %v1081 = vmax.f32 %v929, 0.0
    %v1082 = vmax.f32 %v931, 0.0
    %v1083 = vmax.f32 %v742, 0.0
    %v1084 = vmax.f32 %v744, 0.0
    %v1085 = vmax.f32 %v935, 0.0
    %v1086 = vmax.f32 %v937, 0.0
    %v1087 = vmax.f32 %v746, 0.0
    %v1088 = vmax.f32 %v748, 0.0
    %v1089 = vmax.f32 %v939, 0.0
    %v1090 = vmax.f32 %v941, 0.0
    %v1091 = vmax.f32 %v752, 0.0
    %v1092 = vmax.f32 %v754, 0.0
    %v1093 = vmax.f32 %v945, 0.0
    %v1094 = vmax.f32 %v947, 0.0
    %v1095 = vmax.f32 %v756, 0.0
    %v1096 = vmax.f32 %v758, 0.0
    %v1097 = vmax.f32 %v949, 0.0
    %v1098 = vmax.f32 %v951, 0.0
    %v1099 = vmax.f32 %v762, 0.0
    %v1100 = vmax.f32 %v764, 0.0
    %v1101 = vmax.f32 %v955, 0.0
    %v1102 = vmax.f32 %v957, 0.0
    %v1103 = vmax.f32 %v766, 0.0
    %v1104 = vmax.f32 %v768, 0.0
    %v1105 = vmax.f32 %v959, 0.0
    %v1106 = vmax.f32 %v961, 0.0
    %v1107 = vmax.f32 %v772, 0.0
    %v1108 = vmax.f32 %v774, 0.0
    %v1109 = vmax.f32 %v965, 0.0
    %v1110 = vmax.f32 %v967, 0.0
    %v1111 = vmax.f32 %v776, 0.0
    %v1112 = vmax.f32 %v778, 0.0
    %v1113 = vmax.f32 %v969, 0.0
    %v1114 = vmax.f32 %v971, 0.0
    %v1115 = vmax.f32 %v782, 0.0
    %v1116 = vmax.f32 %v784, 0.0
    %v1117 = vmax.f32 %v975, 0.0
    %v1118 = vmax.f32 %v977, 0.0
    %v1119 = vmax.f32 %v786, 0.0
    %v1120 = vmax.f32 %v788, 0.0
    %v1121 = vmax.f32 %v979, 0.0
    %v1122 = vmax.f32 %v981, 0.0
    %v1123 = vmax.f32 %v792, 0.0
    %v1124 = vmax.f32 %v794, 0.0
    %v1125 = vmax.f32 %v985, 0.0
    %v1126 = vmax.f32 %v987, 0.0
    %v1127 = vmax.f32 %v796, 0.0
    %v1128 = vmax.f32 %v798, 0.0
    %v1129 = vmax.f32 %v989, 0.0
    %v1130 = vmax.f32 %v991, 0.0
    %v1131 = vmax.f32 %v802, 0.0
    %v1132 = vmax.f32 %v804, 0.0
    %v1133 = vmax.f32 %v995, 0.0
    %v1134 = vmax.f32 %v997, 0.0
    %v1135 = vmax.f32 %v806, 0.0
    %v1136 = vmax.f32 %v808, 0.0
    %v1137 = vmax.f32 %v999, 0.0
    %v1138 = vmax.f32 %v1001, 0.0
    %v1139 = vmax.f32 %v812, 0.0
    %v1140 = vmax.f32 %v814, 0.0
    %v1141 = vmax.f32 %v1005, 0.0
    %v1142 = vmax.f32 %v1007, 0.0
    %v1143 = vmax.f32 %v816, 0.0
    %v1144 = vmax.f32 %v818, 0.0
    %v1145 = vmax.f32 %v1009, 0.0
    %v1146 = vmax.f32 %v1011, 0.0
    %v1147 = vmax.f32 %v822, 0.0
    %v1148 = vmax.f32 %v824, 0.0
    %v1149 = vmax.f32 %v1015, 0.0
    %v1150 = vmax.f32 %v1017, 0.0
    %v1151 = vmax.f32 %v826, 0.0
    %v1152 = vmax.f32 %v828, 0.0
    %v1153 = vmax.f32 %v1019, 0.0
    %v1154 = vmax.f32 %v1021, 0.0
    %v1155 = vmax.f32 %v832, 0.0
    %v1156 = vmax.f32 %v834, 0.0
    %v1157 = vmax.f32 %v1025, 0.0
    %v1158 = vmax.f32 %v1027, 0.0
    %v1159 = vmax.f32 %v836, 0.0
    %v1160 = vmax.f32 %v838, 0.0
    %v1161 = vmax.f32 %v1029, 0.0
    %v1162 = vmax.f32 %v1031, 0.0
    %v1163 = vmax.f32 %v842, 0.0
    %v1164 = vmax.f32 %v844, 0.0
    %v1165 = vmax.f32 %v1035, 0.0
    %v1166 = vmax.f32 %v1037, 0.0
    %v1167 = vmax.f32 %v846, 0.0
    %v1168 = vmax.f32 %v848, 0.0
    %v1169 = vmax.f32 %v1039, 0.0
    %v1170 = vmax.f32 %v1041, 0.0
    %v1171 = vpack.c.bf16 %v1047, %v1043
    %v1172 = vpack.c.bf16 %v1048, %v1044
    %v1173 = vpack.c.bf16 %v1049, %v1045
    %v1174 = vpack.c.bf16 %v1050, %v1046
    %v1175 = vpack.c.bf16 %v1055, %v1051
    %v1176 = vpack.c.bf16 %v1056, %v1052
    %v1177 = vpack.c.bf16 %v1057, %v1053
    %v1178 = vpack.c.bf16 %v1058, %v1054
    %v1179 = vpack.c.bf16 %v1063, %v1059
    %v1180 = vpack.c.bf16 %v1064, %v1060
    %v1181 = vpack.c.bf16 %v1065, %v1061
    %v1182 = vpack.c.bf16 %v1066, %v1062
    %v1183 = vpack.c.bf16 %v1071, %v1067
    %v1184 = vpack.c.bf16 %v1072, %v1068
    %v1185 = vpack.c.bf16 %v1073, %v1069
    %v1186 = vpack.c.bf16 %v1074, %v1070
    %v1187 = vpack.c.bf16 %v1079, %v1075
    %v1188 = vpack.c.bf16 %v1080, %v1076
    %v1189 = vpack.c.bf16 %v1081, %v1077
    %v1190 = vpack.c.bf16 %v1082, %v1078
    %v1191 = vpack.c.bf16 %v1087, %v1083
    %v1192 = vpack.c.bf16 %v1088, %v1084
    %v1193 = vpack.c.bf16 %v1089, %v1085
    %v1194 = vpack.c.bf16 %v1090, %v1086
    %v1195 = vpack.c.bf16 %v1095, %v1091
    %v1196 = vpack.c.bf16 %v1096, %v1092
    %v1197 = vpack.c.bf16 %v1097, %v1093
    %v1198 = vpack.c.bf16 %v1098, %v1094
    %v1199 = vpack.c.bf16 %v1103, %v1099
    %v1200 = vpack.c.bf16 %v1104, %v1100
    %v1201 = vpack.c.bf16 %v1105, %v1101
    %v1202 = vpack.c.bf16 %v1106, %v1102
    %v1203 = vpack.c.bf16 %v1111, %v1107
    %v1204 = vpack.c.bf16 %v1112, %v1108
    %v1205 = vpack.c.bf16 %v1113, %v1109
    %v1206 = vpack.c.bf16 %v1114, %v1110
    %v1207 = vpack.c.bf16 %v1119, %v1115
    %v1208 = vpack.c.bf16 %v1120, %v1116
    %v1209 = vpack.c.bf16 %v1121, %v1117
    %v1210 = vpack.c.bf16 %v1122, %v1118
    %v1211 = vpack.c.bf16 %v1127, %v1123
    %v1212 = vpack.c.bf16 %v1128, %v1124
    %v1213 = vpack.c.bf16 %v1129, %v1125
    %v1214 = vpack.c.bf16 %v1130, %v1126
    %v1215 = vpack.c.bf16 %v1135, %v1131
    %v1216 = vpack.c.bf16 %v1136, %v1132
    %v1217 = vpack.c.bf16 %v1137, %v1133
    %v1218 = vpack.c.bf16 %v1138, %v1134
    %v1219 = vpack.c.bf16 %v1143, %v1139
    %v1220 = vpack.c.bf16 %v1144, %v1140
    %v1221 = vpack.c.bf16 %v1145, %v1141
    %v1222 = vpack.c.bf16 %v1146, %v1142
    %v1223 = vpack.c.bf16 %v1151, %v1147
    %v1224 = vpack.c.bf16 %v1152, %v1148
    %v1225 = vpack.c.bf16 %v1153, %v1149
    %v1226 = vpack.c.bf16 %v1154, %v1150
    %v1227 = vpack.c.bf16 %v1159, %v1155
    %v1228 = vpack.c.bf16 %v1160, %v1156
    %v1229 = vpack.c.bf16 %v1161, %v1157
    %v1230 = vpack.c.bf16 %v1162, %v1158
    %v1231 = vpack.c.bf16 %v1167, %v1163
    %v1232 = vpack.c.bf16 %v1168, %v1164
    %v1233 = vpack.c.bf16 %v1169, %v1165
    %v1234 = vpack.c.bf16 %v1170, %v1166
    %v1235 = vld [vmem:[#allocation7] sm:$0xff]
    %v1236 = vld [vmem:[#allocation7 + $0x8] sm:$0xff]
    %v1237 = vld [vmem:[#allocation7 + $0x10] sm:$0xff]
    %v1238 = vld [vmem:[#allocation7 + $0x18] sm:$0xff]
    %v1239 = vld [vmem:[#allocation7 + $0x20] sm:$0xff]
    %v1240 = vld [vmem:[#allocation7 + $0x28] sm:$0xff]
    %v1241 = vld [vmem:[#allocation7 + $0x30] sm:$0xff]
    %v1242 = vld [vmem:[#allocation7 + $0x38] sm:$0xff]
    %v1243 = vld [vmem:[#allocation7 + $0x40] sm:$0xff]
    %v1244 = vld [vmem:[#allocation7 + $0x48] sm:$0xff]
    %v1245 = vld [vmem:[#allocation7 + $0x50] sm:$0xff]
    %v1246 = vld [vmem:[#allocation7 + $0x58] sm:$0xff]
    %v1247 = vld [vmem:[#allocation7 + $0x60] sm:$0xff]
    %v1248 = vld [vmem:[#allocation7 + $0x68] sm:$0xff]
    %v1249 = vld [vmem:[#allocation7 + $0x70] sm:$0xff]
    %v1250 = vld [vmem:[#allocation7 + $0x78] sm:$0xff]
    %v1251 = vld [vmem:[#allocation7 + $0x80] sm:$0xff]
    %v1252 = vld [vmem:[#allocation7 + $0x88] sm:$0xff]
    %v1253 = vld [vmem:[#allocation7 + $0x90] sm:$0xff]
    %v1254 = vld [vmem:[#allocation7 + $0x98] sm:$0xff]
    %v1255 = vld [vmem:[#allocation7 + $0xa0] sm:$0xff]
    %v1256 = vld [vmem:[#allocation7 + $0xa8] sm:$0xff]
    %v1257 = vld [vmem:[#allocation7 + $0xb0] sm:$0xff]
    %v1258 = vld [vmem:[#allocation7 + $0xb8] sm:$0xff]
    %v1259 = vld [vmem:[#allocation7 + $0xc0] sm:$0xff]
    %v1260 = vld [vmem:[#allocation7 + $0xc8] sm:$0xff]
    %v1261 = vld [vmem:[#allocation7 + $0xd0] sm:$0xff]
    %v1262 = vld [vmem:[#allocation7 + $0xd8] sm:$0xff]
    %v1263 = vld [vmem:[#allocation7 + $0xe0] sm:$0xff]
    %v1264 = vld [vmem:[#allocation7 + $0xe8] sm:$0xff]
    %v1265 = vld [vmem:[#allocation7 + $0xf0] sm:$0xff]
    %v1266 = vld [vmem:[#allocation7 + $0xf8] sm:$0xff]
    %v1267 = vld [vmem:[#allocation7 + $0x100] sm:$0xff]
    %v1268 = vld [vmem:[#allocation7 + $0x108] sm:$0xff]
    %v1269 = vld [vmem:[#allocation7 + $0x110] sm:$0xff]
    %v1270 = vld [vmem:[#allocation7 + $0x118] sm:$0xff]
    %v1271 = vld [vmem:[#allocation7 + $0x120] sm:$0xff]
    %v1272 = vld [vmem:[#allocation7 + $0x128] sm:$0xff]
    %v1273 = vld [vmem:[#allocation7 + $0x130] sm:$0xff]
    %v1274 = vld [vmem:[#allocation7 + $0x138] sm:$0xff]
    %v1275 = vld [vmem:[#allocation7 + $0x140] sm:$0xff]
    %v1276 = vld [vmem:[#allocation7 + $0x148] sm:$0xff]
    %v1277 = vld [vmem:[#allocation7 + $0x150] sm:$0xff]
    %v1278 = vld [vmem:[#allocation7 + $0x158] sm:$0xff]
    %v1279 = vld [vmem:[#allocation7 + $0x160] sm:$0xff]
    %v1280 = vld [vmem:[#allocation7 + $0x168] sm:$0xff]
    %v1281 = vld [vmem:[#allocation7 + $0x170] sm:$0xff]
    %v1282 = vld [vmem:[#allocation7 + $0x178] sm:$0xff]
    %v1283 = vld [vmem:[#allocation7 + $0x180] sm:$0xff]
    %v1284 = vld [vmem:[#allocation7 + $0x188] sm:$0xff]
    %v1285 = vld [vmem:[#allocation7 + $0x190] sm:$0xff]
    %v1286 = vld [vmem:[#allocation7 + $0x198] sm:$0xff]
    %v1287 = vld [vmem:[#allocation7 + $0x1a0] sm:$0xff]
    %v1288 = vld [vmem:[#allocation7 + $0x1a8] sm:$0xff]
    %v1289 = vld [vmem:[#allocation7 + $0x1b0] sm:$0xff]
    %v1290 = vld [vmem:[#allocation7 + $0x1b8] sm:$0xff]
    %v1291 = vld [vmem:[#allocation7 + $0x1c0] sm:$0xff]
    %v1292 = vld [vmem:[#allocation7 + $0x1c8] sm:$0xff]
    %v1293 = vld [vmem:[#allocation7 + $0x1d0] sm:$0xff]
    %v1294 = vld [vmem:[#allocation7 + $0x1d8] sm:$0xff]
    %v1295 = vld [vmem:[#allocation7 + $0x1e0] sm:$0xff]
    %v1296 = vld [vmem:[#allocation7 + $0x1e8] sm:$0xff]
    %v1297 = vld [vmem:[#allocation7 + $0x1f0] sm:$0xff]
    %v1298 = vld [vmem:[#allocation7 + $0x1f8] sm:$0xff]
    %v1363 = vunpack.c.l.b16 %v1235
    %v1364 = vunpack.c.h.b16 %v1235
    %v1365 = vunpack.c.l.b16 %v1236
    %v1366 = vunpack.c.h.b16 %v1236
    %v1367 = vunpack.c.l.b16 %v1237
    %v1368 = vunpack.c.h.b16 %v1237
    %v1369 = vunpack.c.l.b16 %v1238
    %v1370 = vunpack.c.h.b16 %v1238
    %v1371 = vunpack.c.l.b16 %v1239
    %v1372 = vunpack.c.h.b16 %v1239
    %v1373 = vunpack.c.l.b16 %v1240
    %v1374 = vunpack.c.h.b16 %v1240
    %v1375 = vunpack.c.l.b16 %v1241
    %v1376 = vunpack.c.h.b16 %v1241
    %v1377 = vunpack.c.l.b16 %v1242
    %v1378 = vunpack.c.h.b16 %v1242
    %v1379 = vunpack.c.l.b16 %v1243
    %v1380 = vunpack.c.h.b16 %v1243
    %v1381 = vunpack.c.l.b16 %v1244
    %v1382 = vunpack.c.h.b16 %v1244
    %v1383 = vunpack.c.l.b16 %v1245
    %v1384 = vunpack.c.h.b16 %v1245
    %v1385 = vunpack.c.l.b16 %v1246
    %v1386 = vunpack.c.h.b16 %v1246
    %v1387 = vunpack.c.l.b16 %v1247
    %v1388 = vunpack.c.h.b16 %v1247
    %v1389 = vunpack.c.l.b16 %v1248
    %v1390 = vunpack.c.h.b16 %v1248
    %v1391 = vunpack.c.l.b16 %v1249
    %v1392 = vunpack.c.h.b16 %v1249
    %v1393 = vunpack.c.l.b16 %v1250
    %v1394 = vunpack.c.h.b16 %v1250
    %v1395 = vunpack.c.l.b16 %v1251
    %v1396 = vunpack.c.h.b16 %v1251
    %v1397 = vunpack.c.l.b16 %v1252
    %v1398 = vunpack.c.h.b16 %v1252
    %v1399 = vunpack.c.l.b16 %v1253
    %v1400 = vunpack.c.h.b16 %v1253
    %v1401 = vunpack.c.l.b16 %v1254
    %v1402 = vunpack.c.h.b16 %v1254
    %v1403 = vunpack.c.l.b16 %v1255
    %v1404 = vunpack.c.h.b16 %v1255
    %v1405 = vunpack.c.l.b16 %v1256
    %v1406 = vunpack.c.h.b16 %v1256
    %v1407 = vunpack.c.l.b16 %v1257
    %v1408 = vunpack.c.h.b16 %v1257
    %v1409 = vunpack.c.l.b16 %v1258
    %v1410 = vunpack.c.h.b16 %v1258
    %v1411 = vunpack.c.l.b16 %v1259
    %v1412 = vunpack.c.h.b16 %v1259
    %v1413 = vunpack.c.l.b16 %v1260
    %v1414 = vunpack.c.h.b16 %v1260
    %v1415 = vunpack.c.l.b16 %v1261
    %v1416 = vunpack.c.h.b16 %v1261
    %v1417 = vunpack.c.l.b16 %v1262
    %v1418 = vunpack.c.h.b16 %v1262
    %v1419 = vunpack.c.l.b16 %v1263
    %v1420 = vunpack.c.h.b16 %v1263
    %v1421 = vunpack.c.l.b16 %v1264
    %v1422 = vunpack.c.h.b16 %v1264
    %v1423 = vunpack.c.l.b16 %v1265
    %v1424 = vunpack.c.h.b16 %v1265
    %v1425 = vunpack.c.l.b16 %v1266
    %v1426 = vunpack.c.h.b16 %v1266
    %v1427 = vunpack.c.l.b16 %v1267
    %v1428 = vunpack.c.h.b16 %v1267
    %v1429 = vunpack.c.l.b16 %v1268
    %v1430 = vunpack.c.h.b16 %v1268
    %v1431 = vunpack.c.l.b16 %v1269
    %v1432 = vunpack.c.h.b16 %v1269
    %v1433 = vunpack.c.l.b16 %v1270
    %v1434 = vunpack.c.h.b16 %v1270
    %v1435 = vunpack.c.l.b16 %v1271
    %v1436 = vunpack.c.h.b16 %v1271
    %v1437 = vunpack.c.l.b16 %v1272
    %v1438 = vunpack.c.h.b16 %v1272
    %v1439 = vunpack.c.l.b16 %v1273
    %v1440 = vunpack.c.h.b16 %v1273
    %v1441 = vunpack.c.l.b16 %v1274
    %v1442 = vunpack.c.h.b16 %v1274
    %v1443 = vunpack.c.l.b16 %v1275
    %v1444 = vunpack.c.h.b16 %v1275
    %v1445 = vunpack.c.l.b16 %v1276
    %v1446 = vunpack.c.h.b16 %v1276
    %v1447 = vunpack.c.l.b16 %v1277
    %v1448 = vunpack.c.h.b16 %v1277
    %v1449 = vunpack.c.l.b16 %v1278
    %v1450 = vunpack.c.h.b16 %v1278
    %v1451 = vunpack.c.l.b16 %v1279
    %v1452 = vunpack.c.h.b16 %v1279
    %v1453 = vunpack.c.l.b16 %v1280
    %v1454 = vunpack.c.h.b16 %v1280
    %v1455 = vunpack.c.l.b16 %v1281
    %v1456 = vunpack.c.h.b16 %v1281
    %v1457 = vunpack.c.l.b16 %v1282
    %v1458 = vunpack.c.h.b16 %v1282
    %v1459 = vunpack.c.l.b16 %v1283
    %v1460 = vunpack.c.h.b16 %v1283
    %v1461 = vunpack.c.l.b16 %v1284
    %v1462 = vunpack.c.h.b16 %v1284
    %v1463 = vunpack.c.l.b16 %v1285
    %v1464 = vunpack.c.h.b16 %v1285
    %v1465 = vunpack.c.l.b16 %v1286
    %v1466 = vunpack.c.h.b16 %v1286
    %v1467 = vunpack.c.l.b16 %v1287
    %v1468 = vunpack.c.h.b16 %v1287
    %v1469 = vunpack.c.l.b16 %v1288
    %v1470 = vunpack.c.h.b16 %v1288
    %v1471 = vunpack.c.l.b16 %v1289
    %v1472 = vunpack.c.h.b16 %v1289
    %v1473 = vunpack.c.l.b16 %v1290
    %v1474 = vunpack.c.h.b16 %v1290
    %v1475 = vunpack.c.l.b16 %v1291
    %v1476 = vunpack.c.h.b16 %v1291
    %v1477 = vunpack.c.l.b16 %v1292
    %v1478 = vunpack.c.h.b16 %v1292
    %v1479 = vunpack.c.l.b16 %v1293
    %v1480 = vunpack.c.h.b16 %v1293
    %v1481 = vunpack.c.l.b16 %v1294
    %v1482 = vunpack.c.h.b16 %v1294
    %v1483 = vunpack.c.l.b16 %v1295
    %v1484 = vunpack.c.h.b16 %v1295
    %v1485 = vunpack.c.l.b16 %v1296
    %v1486 = vunpack.c.h.b16 %v1296
    %v1487 = vunpack.c.l.b16 %v1297
    %v1488 = vunpack.c.h.b16 %v1297
    %v1489 = vunpack.c.l.b16 %v1298
    %v1490 = vunpack.c.h.b16 %v1298
    %v1491 = vpack.c.b16 %v1365, %v1363
    %v1492 = vpack.c.b16 %v1366, %v1364
    %v1493 = vpack.c.b16 %v1369, %v1367
    %v1494 = vpack.c.b16 %v1370, %v1368
    %v1495 = vpack.c.b16 %v1373, %v1371
    %v1496 = vpack.c.b16 %v1374, %v1372
    %v1497 = vpack.c.b16 %v1377, %v1375
    %v1498 = vpack.c.b16 %v1378, %v1376
    %v1499 = vpack.c.b16 %v1381, %v1379
    %v1500 = vpack.c.b16 %v1382, %v1380
    %v1501 = vpack.c.b16 %v1385, %v1383
    %v1502 = vpack.c.b16 %v1386, %v1384
    %v1503 = vpack.c.b16 %v1389, %v1387
    %v1504 = vpack.c.b16 %v1390, %v1388
    %v1505 = vpack.c.b16 %v1393, %v1391
    %v1506 = vpack.c.b16 %v1394, %v1392
    %v1507 = vpack.c.b16 %v1397, %v1395
    %v1508 = vpack.c.b16 %v1398, %v1396
    %v1509 = vpack.c.b16 %v1401, %v1399
    %v1510 = vpack.c.b16 %v1402, %v1400
    %v1511 = vpack.c.b16 %v1405, %v1403
    %v1512 = vpack.c.b16 %v1406, %v1404
    %v1513 = vpack.c.b16 %v1409, %v1407
    %v1514 = vpack.c.b16 %v1410, %v1408
    %v1515 = vpack.c.b16 %v1413, %v1411
    %v1516 = vpack.c.b16 %v1414, %v1412
    %v1517 = vpack.c.b16 %v1417, %v1415
    %v1518 = vpack.c.b16 %v1418, %v1416
    %v1519 = vpack.c.b16 %v1421, %v1419
    %v1520 = vpack.c.b16 %v1422, %v1420
    %v1521 = vpack.c.b16 %v1425, %v1423
    %v1522 = vpack.c.b16 %v1426, %v1424
    %v1523 = vpack.c.b16 %v1429, %v1427
    %v1524 = vpack.c.b16 %v1430, %v1428
    %v1525 = vpack.c.b16 %v1433, %v1431
    %v1526 = vpack.c.b16 %v1434, %v1432
    %v1527 = vpack.c.b16 %v1437, %v1435
    %v1528 = vpack.c.b16 %v1438, %v1436
    %v1529 = vpack.c.b16 %v1441, %v1439
    %v1530 = vpack.c.b16 %v1442, %v1440
    %v1531 = vpack.c.b16 %v1445, %v1443
    %v1532 = vpack.c.b16 %v1446, %v1444
    %v1533 = vpack.c.b16 %v1449, %v1447
    %v1534 = vpack.c.b16 %v1450, %v1448
    %v1535 = vpack.c.b16 %v1453, %v1451
    %v1536 = vpack.c.b16 %v1454, %v1452
    %v1537 = vpack.c.b16 %v1457, %v1455
    %v1538 = vpack.c.b16 %v1458, %v1456
    %v1539 = vpack.c.b16 %v1461, %v1459
    %v1540 = vpack.c.b16 %v1462, %v1460
    %v1541 = vpack.c.b16 %v1465, %v1463
    %v1542 = vpack.c.b16 %v1466, %v1464
    %v1543 = vpack.c.b16 %v1469, %v1467
    %v1544 = vpack.c.b16 %v1470, %v1468
    %v1545 = vpack.c.b16 %v1473, %v1471
    %v1546 = vpack.c.b16 %v1474, %v1472
    %v1547 = vpack.c.b16 %v1477, %v1475
    %v1548 = vpack.c.b16 %v1478, %v1476
    %v1549 = vpack.c.b16 %v1481, %v1479
    %v1550 = vpack.c.b16 %v1482, %v1480
    %v1551 = vpack.c.b16 %v1485, %v1483
    %v1552 = vpack.c.b16 %v1486, %v1484
    %v1553 = vpack.c.b16 %v1489, %v1487
    %v1554 = vpack.c.b16 %v1490, %v1488
    %1619 = vmatprep.subr.bf16.mxu0 %v1492
    %1620 = vmatpush1.bf16.msra.mxu0 %v1491
    %1621 = vmatprep.subr.bf16.mxu0 %v1494
    %1622 = vmatpush1.bf16.msra.mxu0 %v1493
    %1623 = vmatprep.subr.bf16.mxu0 %v1496
    %1624 = vmatpush1.bf16.msra.mxu0 %v1495
    %1625 = vmatprep.subr.bf16.mxu0 %v1498
    %1626 = vmatpush1.bf16.msra.mxu0 %v1497
    %1627 = vmatprep.subr.bf16.mxu0 %v1500
    %1628 = vmatpush1.bf16.msra.mxu0 %v1499
    %1629 = vmatprep.subr.bf16.mxu0 %v1502
    %1630 = vmatpush1.bf16.msra.mxu0 %v1501
    %1631 = vmatprep.subr.bf16.mxu0 %v1504
    %1632 = vmatpush1.bf16.msra.mxu0 %v1503
    %1633 = vmatprep.subr.bf16.mxu0 %v1506
    %1634 = vmatpush1.bf16.msra.mxu0 %v1505
    %1635 = vmatprep.subr.bf16.mxu0 %v1508
    %1636 = vmatpush1.bf16.msra.mxu0 %v1507
    %1637 = vmatprep.subr.bf16.mxu0 %v1510
    %1638 = vmatpush1.bf16.msra.mxu0 %v1509
    %1639 = vmatprep.subr.bf16.mxu0 %v1512
    %1640 = vmatpush1.bf16.msra.mxu0 %v1511
    %1641 = vmatprep.subr.bf16.mxu0 %v1514
    %1642 = vmatpush1.bf16.msra.mxu0 %v1513
    %1643 = vmatprep.subr.bf16.mxu0 %v1516
    %1644 = vmatpush1.bf16.msra.mxu0 %v1515
    %1645 = vmatprep.subr.bf16.mxu0 %v1518
    %1646 = vmatpush1.bf16.msra.mxu0 %v1517
    %1647 = vmatprep.subr.bf16.mxu0 %v1520
    %1648 = vmatpush1.bf16.msra.mxu0 %v1519
    %1649 = vmatprep.subr.bf16.mxu0 %v1522
    %1650 = vmatpush1.bf16.msra.mxu0 %v1521
    %1651 = vmatprep.mubr.bf16.mxu0 %v1172
    %1652 = vmatmul.mubr.bf16.gmra.mrb[0].mxu0 %v1171
    %v1653 = vpop.f32.mrb[0].mxu0
    %v1654 = vadd.f32 0.0, %v1653
    %v1655 = vpop.f32.mrb[0].mxu0
    %v1656 = vadd.f32 0.0, %v1655
    %v1657 = vpop.f32.mrb[0].mxu0
    %v1658 = vadd.f32 0.0, %v1657
    %v1659 = vpop.f32.mrb[0].mxu0
    %v1660 = vadd.f32 0.0, %v1659
    %1661 = vmatprep.mubr.bf16.mxu0 %v1176
    %1662 = vmatmul.mubr.bf16.gmra.mrb[0].mxu0 %v1175
    %v1663 = vpop.f32.mrb[0].mxu0
    %v1664 = vadd.f32 0.0, %v1663
    %v1665 = vpop.f32.mrb[0].mxu0
    %v1666 = vadd.f32 0.0, %v1665
    %v1667 = vpop.f32.mrb[0].mxu0
    %v1668 = vadd.f32 0.0, %v1667
    %v1669 = vpop.f32.mrb[0].mxu0
    %v1670 = vadd.f32 0.0, %v1669
    %1671 = vmatprep.mubr.bf16.mxu0 %v1180
    %1672 = vmatmul.mubr.bf16.gmra.mrb[0].mxu0 %v1179
    %v1673 = vpop.f32.mrb[0].mxu0
    %v1674 = vadd.f32 0.0, %v1673
    %v1675 = vpop.f32.mrb[0].mxu0
    %v1676 = vadd.f32 0.0, %v1675
    %v1677 = vpop.f32.mrb[0].mxu0
    %v1678 = vadd.f32 0.0, %v1677
    %v1679 = vpop.f32.mrb[0].mxu0
    %v1680 = vadd.f32 0.0, %v1679
    %1681 = vmatprep.mubr.bf16.mxu0 %v1184
    %1682 = vmatmul.mubr.bf16.gmra.mrb[0].mxu0 %v1183
    %v1683 = vpop.f32.mrb[0].mxu0
    %v1684 = vadd.f32 0.0, %v1683
    %v1685 = vpop.f32.mrb[0].mxu0
    %v1686 = vadd.f32 0.0, %v1685
    %v1687 = vpop.f32.mrb[0].mxu0
    %v1688 = vadd.f32 0.0, %v1687
    %v1689 = vpop.f32.mrb[0].mxu0
    %v1690 = vadd.f32 0.0, %v1689
    %1691 = vmatprep.mubr.bf16.mxu0 %v1188
    %1692 = vmatmul.mubr.bf16.gmra.mrb[0].mxu0 %v1187
    %v1693 = vpop.f32.mrb[0].mxu0
    %v1694 = vadd.f32 0.0, %v1693
    %v1695 = vpop.f32.mrb[0].mxu0
    %v1696 = vadd.f32 0.0, %v1695
    %v1697 = vpop.f32.mrb[0].mxu0
    %v1698 = vadd.f32 0.0, %v1697
    %v1699 = vpop.f32.mrb[0].mxu0
    %v1700 = vadd.f32 0.0, %v1699
    %1701 = vmatprep.mubr.bf16.mxu0 %v1192
    %1702 = vmatmul.mubr.bf16.gmra.mrb[0].mxu0 %v1191
    %v1703 = vpop.f32.mrb[0].mxu0
    %v1704 = vadd.f32 0.0, %v1703
    %v1705 = vpop.f32.mrb[0].mxu0
    %v1706 = vadd.f32 0.0, %v1705
    %v1707 = vpop.f32.mrb[0].mxu0
    %v1708 = vadd.f32 0.0, %v1707
    %v1709 = vpop.f32.mrb[0].mxu0
    %v1710 = vadd.f32 0.0, %v1709
    %1711 = vmatprep.mubr.bf16.mxu0 %v1196
    %1712 = vmatmul.mubr.bf16.gmra.mrb[0].mxu0 %v1195
    %v1713 = vpop.f32.mrb[0].mxu0
    %v1714 = vadd.f32 0.0, %v1713
    %v1715 = vpop.f32.mrb[0].mxu0
    %v1716 = vadd.f32 0.0, %v1715
    %v1717 = vpop.f32.mrb[0].mxu0
    %v1718 = vadd.f32 0.0, %v1717
    %v1719 = vpop.f32.mrb[0].mxu0
    %v1720 = vadd.f32 0.0, %v1719
    %1721 = vmatprep.mubr.bf16.mxu0 %v1200
    %1722 = vmatmul.mubr.bf16.gmra.mrb[0].mxu0 %v1199
    %v1723 = vpop.f32.mrb[0].mxu0
    %v1724 = vadd.f32 0.0, %v1723
    %v1725 = vpop.f32.mrb[0].mxu0
    %v1726 = vadd.f32 0.0, %v1725
    %v1727 = vpop.f32.mrb[0].mxu0
    %v1728 = vadd.f32 0.0, %v1727
    %v1729 = vpop.f32.mrb[0].mxu0
    %v1730 = vadd.f32 0.0, %v1729
    %1731 = vmatprep.mubr.bf16.mxu0 %v1204
    %1732 = vmatmul.mubr.bf16.gmra.mrb[0].mxu0 %v1203
    %v1733 = vpop.f32.mrb[0].mxu0
    %v1734 = vadd.f32 0.0, %v1733
    %v1735 = vpop.f32.mrb[0].mxu0
    %v1736 = vadd.f32 0.0, %v1735
    %v1737 = vpop.f32.mrb[0].mxu0
    %v1738 = vadd.f32 0.0, %v1737
    %v1739 = vpop.f32.mrb[0].mxu0
    %v1740 = vadd.f32 0.0, %v1739
    %1741 = vmatprep.mubr.bf16.mxu0 %v1208
    %1742 = vmatmul.mubr.bf16.gmra.mrb[0].mxu0 %v1207
    %v1743 = vpop.f32.mrb[0].mxu0
    %v1744 = vadd.f32 0.0, %v1743
    %v1745 = vpop.f32.mrb[0].mxu0
    %v1746 = vadd.f32 0.0, %v1745
    %v1747 = vpop.f32.mrb[0].mxu0
    %v1748 = vadd.f32 0.0, %v1747
    %v1749 = vpop.f32.mrb[0].mxu0
    %v1750 = vadd.f32 0.0, %v1749
    %1751 = vmatprep.mubr.bf16.mxu0 %v1212
    %1752 = vmatmul.mubr.bf16.gmra.mrb[0].mxu0 %v1211
    %v1753 = vpop.f32.mrb[0].mxu0
    %v1754 = vadd.f32 0.0, %v1753
    %v1755 = vpop.f32.mrb[0].mxu0
    %v1756 = vadd.f32 0.0, %v1755
    %v1757 = vpop.f32.mrb[0].mxu0
    %v1758 = vadd.f32 0.0, %v1757
    %v1759 = vpop.f32.mrb[0].mxu0
    %v1760 = vadd.f32 0.0, %v1759
    %1761 = vmatprep.mubr.bf16.mxu0 %v1216
    %1762 = vmatmul.mubr.bf16.gmra.mrb[0].mxu0 %v1215
    %v1763 = vpop.f32.mrb[0].mxu0
    %v1764 = vadd.f32 0.0, %v1763
    %v1765 = vpop.f32.mrb[0].mxu0
    %v1766 = vadd.f32 0.0, %v1765
    %v1767 = vpop.f32.mrb[0].mxu0
    %v1768 = vadd.f32 0.0, %v1767
    %v1769 = vpop.f32.mrb[0].mxu0
    %v1770 = vadd.f32 0.0, %v1769
    %1771 = vmatprep.mubr.bf16.mxu0 %v1220
    %1772 = vmatmul.mubr.bf16.gmra.mrb[0].mxu0 %v1219
    %v1773 = vpop.f32.mrb[0].mxu0
    %v1774 = vadd.f32 0.0, %v1773
    %v1775 = vpop.f32.mrb[0].mxu0
    %v1776 = vadd.f32 0.0, %v1775
    %v1777 = vpop.f32.mrb[0].mxu0
    %v1778 = vadd.f32 0.0, %v1777
    %v1779 = vpop.f32.mrb[0].mxu0
    %v1780 = vadd.f32 0.0, %v1779
    %1781 = vmatprep.mubr.bf16.mxu0 %v1224
    %1782 = vmatmul.mubr.bf16.gmra.mrb[0].mxu0 %v1223
    %v1783 = vpop.f32.mrb[0].mxu0
    %v1784 = vadd.f32 0.0, %v1783
    %v1785 = vpop.f32.mrb[0].mxu0
    %v1786 = vadd.f32 0.0, %v1785
    %v1787 = vpop.f32.mrb[0].mxu0
    %v1788 = vadd.f32 0.0, %v1787
    %v1789 = vpop.f32.mrb[0].mxu0
    %v1790 = vadd.f32 0.0, %v1789
    %1791 = vmatprep.mubr.bf16.mxu0 %v1228
    %1792 = vmatmul.mubr.bf16.gmra.mrb[0].mxu0 %v1227
    %v1793 = vpop.f32.mrb[0].mxu0
    %v1794 = vadd.f32 0.0, %v1793
    %v1795 = vpop.f32.mrb[0].mxu0
    %v1796 = vadd.f32 0.0, %v1795
    %v1797 = vpop.f32.mrb[0].mxu0
    %v1798 = vadd.f32 0.0, %v1797
    %v1799 = vpop.f32.mrb[0].mxu0
    %v1800 = vadd.f32 0.0, %v1799
    %1801 = vmatprep.mubr.bf16.mxu0 %v1232
    %1802 = vmatmul.mubr.bf16.gmra.mrb[0].mxu0 %v1231
    %v1803 = vpop.f32.mrb[0].mxu0
    %v1804 = vadd.f32 0.0, %v1803
    %v1805 = vpop.f32.mrb[0].mxu0
    %v1806 = vadd.f32 0.0, %v1805
    %v1807 = vpop.f32.mrb[0].mxu0
    %v1808 = vadd.f32 0.0, %v1807
    %v1809 = vpop.f32.mrb[0].mxu0
    %v1810 = vadd.f32 0.0, %v1809
    %1811 = vdwg.mxu0
    %1812 = vmatprep.subr.bf16.mxu0 %v1524
    %1813 = vmatpush1.bf16.msra.mxu0 %v1523
    %1814 = vmatprep.subr.bf16.mxu0 %v1526
    %1815 = vmatpush1.bf16.msra.mxu0 %v1525
    %1816 = vmatprep.subr.bf16.mxu0 %v1528
    %1817 = vmatpush1.bf16.msra.mxu0 %v1527
    %1818 = vmatprep.subr.bf16.mxu0 %v1530
    %1819 = vmatpush1.bf16.msra.mxu0 %v1529
    %1820 = vmatprep.subr.bf16.mxu0 %v1532
    %1821 = vmatpush1.bf16.msra.mxu0 %v1531
    %1822 = vmatprep.subr.bf16.mxu0 %v1534
    %1823 = vmatpush1.bf16.msra.mxu0 %v1533
    %1824 = vmatprep.subr.bf16.mxu0 %v1536
    %1825 = vmatpush1.bf16.msra.mxu0 %v1535
    %1826 = vmatprep.subr.bf16.mxu0 %v1538
    %1827 = vmatpush1.bf16.msra.mxu0 %v1537
    %1828 = vmatprep.subr.bf16.mxu0 %v1540
    %1829 = vmatpush1.bf16.msra.mxu0 %v1539
    %1830 = vmatprep.subr.bf16.mxu0 %v1542
    %1831 = vmatpush1.bf16.msra.mxu0 %v1541
    %1832 = vmatprep.subr.bf16.mxu0 %v1544
    %1833 = vmatpush1.bf16.msra.mxu0 %v1543
    %1834 = vmatprep.subr.bf16.mxu0 %v1546
    %1835 = vmatpush1.bf16.msra.mxu0 %v1545
    %1836 = vmatprep.subr.bf16.mxu0 %v1548
    %1837 = vmatpush1.bf16.msra.mxu0 %v1547
    %1838 = vmatprep.subr.bf16.mxu0 %v1550
    %1839 = vmatpush1.bf16.msra.mxu0 %v1549
    %1840 = vmatprep.subr.bf16.mxu0 %v1552
    %1841 = vmatpush1.bf16.msra.mxu0 %v1551
    %1842 = vmatprep.subr.bf16.mxu0 %v1554
    %1843 = vmatpush1.bf16.msra.mxu0 %v1553
    %1844 = vmatprep.mubr.bf16.mxu0 %v1174
    %1845 = vmatmul.mubr.bf16.gmra.mrb[0].mxu0 %v1173
    %v1846 = vpop.f32.mrb[0].mxu0
    %v1847 = vadd.f32 %v1654, %v1846
    %v1848 = vpop.f32.mrb[0].mxu0
    %v1849 = vadd.f32 %v1656, %v1848
    %v1850 = vpop.f32.mrb[0].mxu0
    %v1851 = vadd.f32 %v1658, %v1850
    %v1852 = vpop.f32.mrb[0].mxu0
    %v1853 = vadd.f32 %v1660, %v1852
    %1854 = vmatprep.mubr.bf16.mxu0 %v1178
    %1855 = vmatmul.mubr.bf16.gmra.mrb[0].mxu0 %v1177
    %v1856 = vpop.f32.mrb[0].mxu0
    %v1857 = vadd.f32 %v1664, %v1856
    %v1858 = vpop.f32.mrb[0].mxu0
    %v1859 = vadd.f32 %v1666, %v1858
    %v1860 = vpop.f32.mrb[0].mxu0
    %v1861 = vadd.f32 %v1668, %v1860
    %v1862 = vpop.f32.mrb[0].mxu0
    %v1863 = vadd.f32 %v1670, %v1862
    %1864 = vmatprep.mubr.bf16.mxu0 %v1182
    %1865 = vmatmul.mubr.bf16.gmra.mrb[0].mxu0 %v1181
    %v1866 = vpop.f32.mrb[0].mxu0
    %v1867 = vadd.f32 %v1674, %v1866
    %v1868 = vpop.f32.mrb[0].mxu0
    %v1869 = vadd.f32 %v1676, %v1868
    %v1870 = vpop.f32.mrb[0].mxu0
    %v1871 = vadd.f32 %v1678, %v1870
    %v1872 = vpop.f32.mrb[0].mxu0
    %v1873 = vadd.f32 %v1680, %v1872
    %1874 = vmatprep.mubr.bf16.mxu0 %v1186
    %1875 = vmatmul.mubr.bf16.gmra.mrb[0].mxu0 %v1185
    %v1876 = vpop.f32.mrb[0].mxu0
    %v1877 = vadd.f32 %v1684, %v1876
    %v1878 = vpop.f32.mrb[0].mxu0
    %v1879 = vadd.f32 %v1686, %v1878
    %v1880 = vpop.f32.mrb[0].mxu0
    %v1881 = vadd.f32 %v1688, %v1880
    %v1882 = vpop.f32.mrb[0].mxu0
    %v1883 = vadd.f32 %v1690, %v1882
    %1884 = vmatprep.mubr.bf16.mxu0 %v1190
    %1885 = vmatmul.mubr.bf16.gmra.mrb[0].mxu0 %v1189
    %v1886 = vpop.f32.mrb[0].mxu0
    %v1887 = vadd.f32 %v1694, %v1886
    %v1888 = vpop.f32.mrb[0].mxu0
    %v1889 = vadd.f32 %v1696, %v1888
    %v1890 = vpop.f32.mrb[0].mxu0
    %v1891 = vadd.f32 %v1698, %v1890
    %v1892 = vpop.f32.mrb[0].mxu0
    %v1893 = vadd.f32 %v1700, %v1892
    %1894 = vmatprep.mubr.bf16.mxu0 %v1194
    %1895 = vmatmul.mubr.bf16.gmra.mrb[0].mxu0 %v1193
    %v1896 = vpop.f32.mrb[0].mxu0
    %v1897 = vadd.f32 %v1704, %v1896
    %v1898 = vpop.f32.mrb[0].mxu0
    %v1899 = vadd.f32 %v1706, %v1898
    %v1900 = vpop.f32.mrb[0].mxu0
    %v1901 = vadd.f32 %v1708, %v1900
    %v1902 = vpop.f32.mrb[0].mxu0
    %v1903 = vadd.f32 %v1710, %v1902
    %1904 = vmatprep.mubr.bf16.mxu0 %v1198
    %1905 = vmatmul.mubr.bf16.gmra.mrb[0].mxu0 %v1197
    %v1906 = vpop.f32.mrb[0].mxu0
    %v1907 = vadd.f32 %v1714, %v1906
    %v1908 = vpop.f32.mrb[0].mxu0
    %v1909 = vadd.f32 %v1716, %v1908
    %v1910 = vpop.f32.mrb[0].mxu0
    %v1911 = vadd.f32 %v1718, %v1910
    %v1912 = vpop.f32.mrb[0].mxu0
    %v1913 = vadd.f32 %v1720, %v1912
    %1914 = vmatprep.mubr.bf16.mxu0 %v1202
    %1915 = vmatmul.mubr.bf16.gmra.mrb[0].mxu0 %v1201
    %v1916 = vpop.f32.mrb[0].mxu0
    %v1917 = vadd.f32 %v1724, %v1916
    %v1918 = vpop.f32.mrb[0].mxu0
    %v1919 = vadd.f32 %v1726, %v1918
    %v1920 = vpop.f32.mrb[0].mxu0
    %v1921 = vadd.f32 %v1728, %v1920
    %v1922 = vpop.f32.mrb[0].mxu0
    %v1923 = vadd.f32 %v1730, %v1922
    %1924 = vmatprep.mubr.bf16.mxu0 %v1206
    %1925 = vmatmul.mubr.bf16.gmra.mrb[0].mxu0 %v1205
    %v1926 = vpop.f32.mrb[0].mxu0
    %v1927 = vadd.f32 %v1734, %v1926
    %v1928 = vpop.f32.mrb[0].mxu0
    %v1929 = vadd.f32 %v1736, %v1928
    %v1930 = vpop.f32.mrb[0].mxu0
    %v1931 = vadd.f32 %v1738, %v1930
    %v1932 = vpop.f32.mrb[0].mxu0
    %v1933 = vadd.f32 %v1740, %v1932
    %1934 = vmatprep.mubr.bf16.mxu0 %v1210
    %1935 = vmatmul.mubr.bf16.gmra.mrb[0].mxu0 %v1209
    %v1936 = vpop.f32.mrb[0].mxu0
    %v1937 = vadd.f32 %v1744, %v1936
    %v1938 = vpop.f32.mrb[0].mxu0
    %v1939 = vadd.f32 %v1746, %v1938
    %v1940 = vpop.f32.mrb[0].mxu0
    %v1941 = vadd.f32 %v1748, %v1940
    %v1942 = vpop.f32.mrb[0].mxu0
    %v1943 = vadd.f32 %v1750, %v1942
    %1944 = vmatprep.mubr.bf16.mxu0 %v1214
    %1945 = vmatmul.mubr.bf16.gmra.mrb[0].mxu0 %v1213
    %v1946 = vpop.f32.mrb[0].mxu0
    %v1947 = vadd.f32 %v1754, %v1946
    %v1948 = vpop.f32.mrb[0].mxu0
    %v1949 = vadd.f32 %v1756, %v1948
    %v1950 = vpop.f32.mrb[0].mxu0
    %v1951 = vadd.f32 %v1758, %v1950
    %v1952 = vpop.f32.mrb[0].mxu0
    %v1953 = vadd.f32 %v1760, %v1952
    %1954 = vmatprep.mubr.bf16.mxu0 %v1218
    %1955 = vmatmul.mubr.bf16.gmra.mrb[0].mxu0 %v1217
    %v1956 = vpop.f32.mrb[0].mxu0
    %v1957 = vadd.f32 %v1764, %v1956
    %v1958 = vpop.f32.mrb[0].mxu0
    %v1959 = vadd.f32 %v1766, %v1958
    %v1960 = vpop.f32.mrb[0].mxu0
    %v1961 = vadd.f32 %v1768, %v1960
    %v1962 = vpop.f32.mrb[0].mxu0
    %v1963 = vadd.f32 %v1770, %v1962
    %1964 = vmatprep.mubr.bf16.mxu0 %v1222
    %1965 = vmatmul.mubr.bf16.gmra.mrb[0].mxu0 %v1221
    %v1966 = vpop.f32.mrb[0].mxu0
    %v1967 = vadd.f32 %v1774, %v1966
    %v1968 = vpop.f32.mrb[0].mxu0
    %v1969 = vadd.f32 %v1776, %v1968
    %v1970 = vpop.f32.mrb[0].mxu0
    %v1971 = vadd.f32 %v1778, %v1970
    %v1972 = vpop.f32.mrb[0].mxu0
    %v1973 = vadd.f32 %v1780, %v1972
    %1974 = vmatprep.mubr.bf16.mxu0 %v1226
    %1975 = vmatmul.mubr.bf16.gmra.mrb[0].mxu0 %v1225
    %v1976 = vpop.f32.mrb[0].mxu0
    %v1977 = vadd.f32 %v1784, %v1976
    %v1978 = vpop.f32.mrb[0].mxu0
    %v1979 = vadd.f32 %v1786, %v1978
    %v1980 = vpop.f32.mrb[0].mxu0
    %v1981 = vadd.f32 %v1788, %v1980
    %v1982 = vpop.f32.mrb[0].mxu0
    %v1983 = vadd.f32 %v1790, %v1982
    %1984 = vmatprep.mubr.bf16.mxu0 %v1230
    %1985 = vmatmul.mubr.bf16.gmra.mrb[0].mxu0 %v1229
    %v1986 = vpop.f32.mrb[0].mxu0
    %v1987 = vadd.f32 %v1794, %v1986
    %v1988 = vpop.f32.mrb[0].mxu0
    %v1989 = vadd.f32 %v1796, %v1988
    %v1990 = vpop.f32.mrb[0].mxu0
    %v1991 = vadd.f32 %v1798, %v1990
    %v1992 = vpop.f32.mrb[0].mxu0
    %v1993 = vadd.f32 %v1800, %v1992
    %1994 = vmatprep.mubr.bf16.mxu0 %v1234
    %1995 = vmatmul.mubr.bf16.gmra.mrb[0].mxu0 %v1233
    %v1996 = vpop.f32.mrb[0].mxu0
    %v1997 = vadd.f32 %v1804, %v1996
    %v1998 = vpop.f32.mrb[0].mxu0
    %v1999 = vadd.f32 %v1806, %v1998
    %v2000 = vpop.f32.mrb[0].mxu0
    %v2001 = vadd.f32 %v1808, %v2000
    %v2002 = vpop.f32.mrb[0].mxu0
    %v2003 = vadd.f32 %v1810, %v2002
    %2004 = vdwg.mxu0
    %2005 = vst [vmem:[#allocation8] sm:$0xff] %v1847
    %2006 = vst [vmem:[#allocation8 + $0x8] sm:$0xff] %v1849
    %2007 = vst [vmem:[#allocation8 + $0x10] sm:$0xff] %v1851
    %2008 = vst [vmem:[#allocation8 + $0x18] sm:$0xff] %v1853
    %2009 = vst [vmem:[#allocation8 + $0x20] sm:$0xff] %v1857
    %2010 = vst [vmem:[#allocation8 + $0x28] sm:$0xff] %v1859
    %2011 = vst [vmem:[#allocation8 + $0x30] sm:$0xff] %v1861
    %2012 = vst [vmem:[#allocation8 + $0x38] sm:$0xff] %v1863
    %2013 = vst [vmem:[#allocation8 + $0x40] sm:$0xff] %v1867
    %2014 = vst [vmem:[#allocation8 + $0x48] sm:$0xff] %v1869
    %2015 = vst [vmem:[#allocation8 + $0x50] sm:$0xff] %v1871
    %2016 = vst [vmem:[#allocation8 + $0x58] sm:$0xff] %v1873
    %2017 = vst [vmem:[#allocation8 + $0x60] sm:$0xff] %v1877
    %2018 = vst [vmem:[#allocation8 + $0x68] sm:$0xff] %v1879
    %2019 = vst [vmem:[#allocation8 + $0x70] sm:$0xff] %v1881
    %2020 = vst [vmem:[#allocation8 + $0x78] sm:$0xff] %v1883
    %2021 = vst [vmem:[#allocation8 + $0x80] sm:$0xff] %v1887
    %2022 = vst [vmem:[#allocation8 + $0x88] sm:$0xff] %v1889
    %2023 = vst [vmem:[#allocation8 + $0x90] sm:$0xff] %v1891
    %2024 = vst [vmem:[#allocation8 + $0x98] sm:$0xff] %v1893
    %2025 = vst [vmem:[#allocation8 + $0xa0] sm:$0xff] %v1897
    %2026 = vst [vmem:[#allocation8 + $0xa8] sm:$0xff] %v1899
    %2027 = vst [vmem:[#allocation8 + $0xb0] sm:$0xff] %v1901
    %2028 = vst [vmem:[#allocation8 + $0xb8] sm:$0xff] %v1903
    %2029 = vst [vmem:[#allocation8 + $0xc0] sm:$0xff] %v1907
    %2030 = vst [vmem:[#allocation8 + $0xc8] sm:$0xff] %v1909
    %2031 = vst [vmem:[#allocation8 + $0xd0] sm:$0xff] %v1911
    %2032 = vst [vmem:[#allocation8 + $0xd8] sm:$0xff] %v1913
    %2033 = vst [vmem:[#allocation8 + $0xe0] sm:$0xff] %v1917
    %2034 = vst [vmem:[#allocation8 + $0xe8] sm:$0xff] %v1919
    %2035 = vst [vmem:[#allocation8 + $0xf0] sm:$0xff] %v1921
    %2036 = vst [vmem:[#allocation8 + $0xf8] sm:$0xff] %v1923
    %2037 = vst [vmem:[#allocation8 + $0x100] sm:$0xff] %v1927
    %2038 = vst [vmem:[#allocation8 + $0x108] sm:$0xff] %v1929
    %2039 = vst [vmem:[#allocation8 + $0x110] sm:$0xff] %v1931
    %2040 = vst [vmem:[#allocation8 + $0x118] sm:$0xff] %v1933
    %2041 = vst [vmem:[#allocation8 + $0x120] sm:$0xff] %v1937
    %2042 = vst [vmem:[#allocation8 + $0x128] sm:$0xff] %v1939
    %2043 = vst [vmem:[#allocation8 + $0x130] sm:$0xff] %v1941
    %2044 = vst [vmem:[#allocation8 + $0x138] sm:$0xff] %v1943
    %2045 = vst [vmem:[#allocation8 + $0x140] sm:$0xff] %v1947
    %2046 = vst [vmem:[#allocation8 + $0x148] sm:$0xff] %v1949
    %2047 = vst [vmem:[#allocation8 + $0x150] sm:$0xff] %v1951
    %2048 = vst [vmem:[#allocation8 + $0x158] sm:$0xff] %v1953
    %2049 = vst [vmem:[#allocation8 + $0x160] sm:$0xff] %v1957
    %2050 = vst [vmem:[#allocation8 + $0x168] sm:$0xff] %v1959
    %2051 = vst [vmem:[#allocation8 + $0x170] sm:$0xff] %v1961
    %2052 = vst [vmem:[#allocation8 + $0x178] sm:$0xff] %v1963
    %2053 = vst [vmem:[#allocation8 + $0x180] sm:$0xff] %v1967
    %2054 = vst [vmem:[#allocation8 + $0x188] sm:$0xff] %v1969
    %2055 = vst [vmem:[#allocation8 + $0x190] sm:$0xff] %v1971
    %2056 = vst [vmem:[#allocation8 + $0x198] sm:$0xff] %v1973
    %2057 = vst [vmem:[#allocation8 + $0x1a0] sm:$0xff] %v1977
    %2058 = vst [vmem:[#allocation8 + $0x1a8] sm:$0xff] %v1979
    %2059 = vst [vmem:[#allocation8 + $0x1b0] sm:$0xff] %v1981
    %2060 = vst [vmem:[#allocation8 + $0x1b8] sm:$0xff] %v1983
    %2061 = vst [vmem:[#allocation8 + $0x1c0] sm:$0xff] %v1987
    %2062 = vst [vmem:[#allocation8 + $0x1c8] sm:$0xff] %v1989
    %2063 = vst [vmem:[#allocation8 + $0x1d0] sm:$0xff] %v1991
    %2064 = vst [vmem:[#allocation8 + $0x1d8] sm:$0xff] %v1993
    %2065 = vst [vmem:[#allocation8 + $0x1e0] sm:$0xff] %v1997
    %2066 = vst [vmem:[#allocation8 + $0x1e8] sm:$0xff] %v1999
    %2067 = vst [vmem:[#allocation8 + $0x1f0] sm:$0xff] %v2001
    %2068 = vst [vmem:[#allocation8 + $0x1f8] sm:$0xff] %v2003
    // Predicated region
    $region30: #{tpu_custom_call.1} parent=1 // pred_check
      _
    $region31: #{tpu_custom_call.1} parent=1 // pred_check_branch
      %2070 = sbr.rel (0) target = $region33
    $region32: #{tpu_custom_call.1} parent=1 // pred_region
      %s2072 = ssub.s32 8192, 8192
      %2073 = vsyncadd [#allocation4], %s2072
      %s2074 = sshll.u32 [#allocation8], 4
      %s2075 = int_to_ptr.vmem [resolvable:$true] %s2074
      %2080 = dma.vmem_to_hbm [thread:$0]  %s2075, 8192, %s4, [#allocation4], 256, 256, 16
    $region33: #{tpu_custom_call.1} parent=1 // pred_fallthru
      _
    // Predicated region
    $region34: #{tpu_custom_call.1} parent=1 // pred_check
      _
    $region35: #{tpu_custom_call.1} parent=1 // pred_check_branch
      %2082 = sbr.rel (0) target = $region37
    $region36: #{tpu_custom_call.1} parent=1 // pred_region
      %2083 = dma.done [#allocation4], 8192
    $region37: #{tpu_custom_call.1} parent=1 // pred_fallthru
      _
    %2084 = vsyncpa [#allocation3], 1
    %2085 = vsyncpa [#allocation6], 1
    %2086 = vsyncpa [#allocation4], 1

</llo_original>
